<compile_context>
chip_gen: v6e
topology: v6e:2x2x1
jax: 0.10.0
libtpu: 0.0.40
codegen_flags: <defaults>
</compile_context>

<pallas_src>
import jax
import jax.numpy as jnp
from jax.experimental import pallas as pl
from jax.experimental.pallas import tpu as pltpu


C1P = 8            # conv1 output channels padded (6 real)
C2 = 16            # conv2 output channels (16 real)
MLP_PAD = 128      # MLP hidden width padding (lane-dense)
MAX_BATCH_BLOCK = 8

PARAM_ORDER = ("w1e", "w1o", "b1", "w2e", "w2o", "b2",
               "wf1", "bf1", "wf2", "bf2", "wf3", "bf3", "wf4", "bf4")


# ----------------------------------------------------------------------------
# Fused kernel
# ----------------------------------------------------------------------------

def lenet_kernel(x_ref, w1e_ref, w1o_ref, b1_ref, w2e_ref, w2o_ref, b2_ref,
                 wf1_ref, bf1_ref, wf2_ref, bf2_ref, wf3_ref, bf3_ref,
                 wf4_ref, bf4_ref, o_ref):
    """x_ref: (4, Bb, 8, 96) f32 -- rows of the 32x32 NHWC image split mod 4,
    lanes = (W=32, Cin=3) flattened."""
    bb = x_ref.shape[1]
    x = x_ref[...]                                               # f32, tiny

    # ---------------- conv1 + bn1 + relu + maxpool1 -------------------------
    # lhs rows ordered (row_parity ip, pool_row a, batch b, pooled_row i').
    # Row (ip,a,b,i') holds input rows 4*i' + 2*ip + a + di (di=0..4), i.e. the
    # height taps of conv output row 2*(2*i'+ip)+a, laid out as lanes (di,w,ci).
    groups = []
    for ip in range(2):
        for a in range(2):
            rows_b = []
            for b in range(bb):
                pieces = []
                for di in range(5):
                    s = 2 * ip + a + di            # input row = 4*i' + s
                    pieces.append(x[s & 3, b, (s >> 2):(s >> 2) + 7, :])  # (7,96)
                rows_b.append(jnp.concatenate(pieces, axis=-1))           # (7,480)
            groups.append(jnp.concatenate(rows_b, axis=0))                # (bb*7,480)
    lhs1 = jnp.concatenate(groups, axis=0).astype(jnp.bfloat16)           # (4*bb*7,480)

    b1 = b1_ref[...]
    ye = jnp.dot(lhs1, w1e_ref[...], preferred_element_type=jnp.float32) + b1
    yo = jnp.dot(lhs1, w1o_ref[...], preferred_element_type=jnp.float32) + b1
    # relu + width half of the 2x2 pool (even vs odd conv columns)
    y1 = jnp.maximum(jnp.maximum(ye, yo), 0.0)                            # (4*bb*7,112)
    # height half of the pool: max over pool_row a, for each row parity ip
    n1 = bb * 7
    z1 = [jnp.maximum(y1[(2 * ip) * n1:(2 * ip + 1) * n1, :],
                      y1[(2 * ip + 1) * n1:(2 * ip + 2) * n1, :])
          for ip in range(2)]
    # z1[ip]: rows (b, i'), lanes (j, c1)  == pool1 output rows 2*i'+ip.

    # ---------------- conv2 + bn2 + relu + maxpool2 -------------------------
    groups = []
    for a2 in range(2):
        rows_b = []
        for b in range(bb):
            pieces = []
            for di in range(5):
                s = a2 + di                         # pool1 row = 2*i2 + s
                base = b * 7 + (s >> 1)
                pieces.append(z1[s & 1][base:base + 5, :])                # (5,112)
            rows_b.append(jnp.concatenate(pieces, axis=-1))               # (5,560)
        groups.append(jnp.concatenate(rows_b, axis=0))                    # (bb*5,560)
    lhs2 = jnp.concatenate(groups, axis=0).astype(jnp.bfloat16)           # (2*bb*5,560)

    b2 = b2_ref[...]
    ye = jnp.dot(lhs2, w2e_ref[...], preferred_element_type=jnp.float32) + b2
    yo = jnp.dot(lhs2, w2o_ref[...], preferred_element_type=jnp.float32) + b2
    y2 = jnp.maximum(jnp.maximum(ye, yo), 0.0)                            # (2*bb*5,80)
    n2 = bb * 5
    z2 = jnp.maximum(y2[0:n2, :], y2[n2:2 * n2, :])                       # (bb*5,80)
    # z2: rows (b, i2), lanes (j2, c2)  == pool2 output.

    # ---------------- flatten + MLP (dropout = identity in eval) ------------
    # Flatten order per sample is (i2, j2, c2); fc1 rows were permuted at init
    # so this matches PyTorch's NCHW .view(B, -1).
    feats = []
    for b in range(bb):
        base = b * 5
        feats.append(jnp.concatenate([z2[base + i:base + i + 1, :]
                                      for i in range(5)], axis=-1))       # (1,400)
    f = jnp.concatenate(feats, axis=0).astype(jnp.bfloat16)               # (bb,400)

    h = jnp.dot(f, wf1_ref[...], preferred_element_type=jnp.float32) + bf1_ref[...]
    h = jnp.maximum(h, 0.0).astype(jnp.bfloat16)
    h = jnp.dot(h, wf2_ref[...], preferred_element_type=jnp.float32) + bf2_ref[...]
    h = jnp.maximum(h, 0.0).astype(jnp.bfloat16)
    h = jnp.dot(h, wf3_ref[...], preferred_element_type=jnp.float32) + bf3_ref[...]
    h = jnp.maximum(h, 0.0).astype(jnp.bfloat16)
    h = jnp.dot(h, wf4_ref[...], preferred_element_type=jnp.float32) + bf4_ref[...]
    o_ref[...] = h[:, 0:1]                                                # (bb,1)


# ----------------------------------------------------------------------------
# Forward wrapper
# ----------------------------------------------------------------------------

@jax.jit
def net_forward(x_nchw, params):
    """Eval-mode forward pass of Net.  x_nchw: (B, 3, 32, 32) float32."""
    B = x_nchw.shape[0]
    bb = min(B, MAX_BATCH_BLOCK)
    grid = (pl.cdiv(B, bb),)

    # NCHW -> NHWC, flatten (W, Cin) into lanes, split rows mod 4 (cheap, 24 KB).
    x = jnp.transpose(x_nchw, (0, 2, 3, 1)).astype(jnp.float32)   # (B,32,32,3)
    x = x.reshape(B, 8, 4, 96)                                    # h = 4*h1 + h2
    x = jnp.transpose(x, (2, 0, 1, 3))                            # (4,B,8,96)

    def fixed_spec(a):
        nd = a.ndim
        return pl.BlockSpec(a.shape, lambda i, _nd=nd: (0,) * _nd)

    weights = [params[k] for k in PARAM_ORDER]
    in_specs = [pl.BlockSpec((4, bb, 8, 96), lambda i: (0, i, 0, 0))]
    in_specs += [fixed_spec(w) for w in weights]

    out = pl.pallas_call(
        lenet_kernel,
        out_shape=jax.ShapeDtypeStruct((B, 1), jnp.float32),
        grid=grid,
        in_specs=in_specs,
        out_specs=pl.BlockSpec((bb, 1), lambda i: (i, 0)),
        compiler_params=pltpu.CompilerParams(
            dimension_semantics=("parallel",)),
    )(x, *weights)
    return out[:, 0]


# ----------------------------------------------------------------------------
# Parameters: torch-layout kaiming weights / zero biases / default BN stats,
# transformed once into fused banded GEMM weights.
# ----------------------------------------------------------------------------

def init_params(key):
    ks = jax.random.split(key, 6)

    def kaiming(k, shape, fan_in):
        return jax.random.normal(k, shape, jnp.float32) * jnp.sqrt(2.0 / fan_in)

    eps = 1e-5
    w1_t = kaiming(ks[0], (6, 3, 5, 5), 3 * 5 * 5)      # (Cout, Cin, KH, KW)
    b1_t = jnp.zeros((6,), jnp.float32)
    w2_t = kaiming(ks[1], (16, 6, 5, 5), 6 * 5 * 5)
    b2_t = jnp.zeros((16,), jnp.float32)
    wf1_t = kaiming(ks[2], (120, 400), 400); bf1_t = jnp.zeros((120,), jnp.float32)
    wf2_t = kaiming(ks[3], (84, 120), 120);  bf2_t = jnp.zeros((84,), jnp.float32)
    wf3_t = kaiming(ks[4], (10, 84), 84);    bf3_t = jnp.zeros((10,), jnp.float32)
    wf4_t = kaiming(ks[5], (1, 10), 10);     bf4_t = jnp.zeros((1,), jnp.float32)

    # BatchNorm eval mode: gamma=1, beta=0, running mean=0, var=1.
    def bn_fold(n):
        gamma, beta = jnp.ones((n,)), jnp.zeros((n,))
        mean, var = jnp.zeros((n,)), jnp.ones((n,))
        scale = gamma / jnp.sqrt(var + eps)
        return scale, beta - mean * scale

    s1, t1 = bn_fold(6)
    s2, t2 = bn_fold(16)
    kw = jnp.arange(5)

    # conv1: banded GEMM weights; columns ordered (pooled col j, channel),
    # split into even / odd conv output columns (the width half of the pool).
    sel1 = (jnp.arange(32)[None, :, None]
            == jnp.arange(28)[None, None, :] + kw[:, None, None]).astype(jnp.float32)
    band1 = jnp.einsum("KWC,OIHK->HWICO", sel1, w1_t * s1[:, None, None, None])
    band1 = jnp.pad(band1, ((0, 0),) * 4 + ((0, C1P - 6),))        # (5,32,3,28,8)
    w1e = band1[:, :, :, 0::2, :].reshape(5 * 32 * 3, 14 * C1P)
    w1o = band1[:, :, :, 1::2, :].reshape(5 * 32 * 3, 14 * C1P)
    b1 = jnp.tile(jnp.pad(b1_t * s1 + t1, (0, C1P - 6)), 14).reshape(1, 14 * C1P)

    # conv2
    sel2 = (jnp.arange(14)[None, :, None]
            == jnp.arange(10)[None, None, :] + kw[:, None, None]).astype(jnp.float32)
    band2 = jnp.einsum("KWC,OIHK->HWICO", sel2, w2_t * s2[:, None, None, None])
    band2 = jnp.pad(band2, ((0, 0), (0, 0), (0, C1P - 6), (0, 0), (0, 0)))  # (5,14,8,10,16)
    w2e = band2[:, :, :, 0::2, :].reshape(5 * 14 * C1P, 5 * C2)
    w2o = band2[:, :, :, 1::2, :].reshape(5 * 14 * C1P, 5 * C2)
    b2 = jnp.tile(b2_t * s2 + t2, 5).reshape(1, 5 * C2)

    # MLP: permute fc1 rows to the kernel's (i2, j2, c2) flatten order
    # (== PyTorch NCHW .view order), pad all hidden dims to 128 lanes.
    i2g, j2g, cog = jnp.meshgrid(jnp.arange(5), jnp.arange(5), jnp.arange(C2),
                                 indexing="ij")
    perm = (cog * 25 + i2g * 5 + j2g).reshape(-1)                  # torch flat index
    wf1 = jnp.pad(wf1_t.T[perm, :], ((0, 0), (0, MLP_PAD - 120)))
    bf1 = jnp.pad(bf1_t, (0, MLP_PAD - 120)).reshape(1, MLP_PAD)
    wf2 = jnp.pad(wf2_t.T, ((0, MLP_PAD - 120), (0, MLP_PAD - 84)))
    bf2 = jnp.pad(bf2_t, (0, MLP_PAD - 84)).reshape(1, MLP_PAD)
    wf3 = jnp.pad(wf3_t.T, ((0, MLP_PAD - 84), (0, MLP_PAD - 10)))
    bf3 = jnp.pad(bf3_t, (0, MLP_PAD - 10)).reshape(1, MLP_PAD)
    wf4 = jnp.pad(wf4_t.T, ((0, MLP_PAD - 10), (0, MLP_PAD - 1)))
    bf4 = jnp.pad(bf4_t, (0, MLP_PAD - 1)).reshape(1, MLP_PAD)

    bf16 = jnp.bfloat16
    return dict(
        w1e=w1e.astype(bf16), w1o=w1o.astype(bf16), b1=b1,
        w2e=w2e.astype(bf16), w2o=w2o.astype(bf16), b2=b2,
        wf1=wf1.astype(bf16), bf1=bf1,
        wf2=wf2.astype(bf16), bf2=bf2,
        wf3=wf3.astype(bf16), bf3=bf3,
        wf4=wf4.astype(bf16), bf4=bf4,
    )


# ----------------------------------------------------------------------------
# Main
# ----------------------------------------------------------------------------

if __name__ == "__main__":
    key = jax.random.PRNGKey(0)
    k_x, k_p = jax.random.split(key)

    # fc1 expects 400 = 16*5*5 features => input spatial size must be 32x32.
    x = jax.random.normal(k_x, (2, 3, 32, 32), jnp.float32)   # NCHW like PyTorch
    params = init_params(k_p)

    out = net_forward(x, params)
    jax.block_until_ready(out)
    assert out.shape == (2,) and out.dtype == jnp.float32
    assert bool(jnp.all(jnp.isfinite(out)))
    print("KERNEL_OK")
</pallas_src>

<mosaic_0001>
module attributes {stable_mosaic.version = 11 : i64} {
  func.func @lenet_kernel(%arg0: i32, %arg1: memref<4x2x8x96xf32, #tpu.memory_space<vmem>>, %arg2: memref<480x112xbf16, #tpu.memory_space<vmem>>, %arg3: memref<480x112xbf16, #tpu.memory_space<vmem>>, %arg4: memref<1x112xf32, #tpu.memory_space<vmem>>, %arg5: memref<560x80xbf16, #tpu.memory_space<vmem>>, %arg6: memref<560x80xbf16, #tpu.memory_space<vmem>>, %arg7: memref<1x80xf32, #tpu.memory_space<vmem>>, %arg8: memref<400x128xbf16, #tpu.memory_space<vmem>>, %arg9: memref<1x128xf32, #tpu.memory_space<vmem>>, %arg10: memref<128x128xbf16, #tpu.memory_space<vmem>>, %arg11: memref<1x128xf32, #tpu.memory_space<vmem>>, %arg12: memref<128x128xbf16, #tpu.memory_space<vmem>>, %arg13: memref<1x128xf32, #tpu.memory_space<vmem>>, %arg14: memref<128x128xbf16, #tpu.memory_space<vmem>>, %arg15: memref<1x128xf32, #tpu.memory_space<vmem>>, %arg16: memref<2x1xf32, #tpu.memory_space<vmem>>) attributes {dimension_semantics = [#tpu.dimension_semantics<parallel>], iteration_bounds = array<i64: 1>, scalar_prefetch = 0 : i64, scratch_operands = 0 : i64, tpu.core_type = #tpu.core_type<tc>, window_params = [{transform_indices = @transform_0, window_bounds = array<i64: 4, 2, 8, 96>}, {pipeline_mode = #tpu.pipeline_mode<synchronous>, transform_indices = @transform_1, window_bounds = array<i64: 480, 112>}, {pipeline_mode = #tpu.pipeline_mode<synchronous>, transform_indices = @transform_2, window_bounds = array<i64: 480, 112>}, {pipeline_mode = #tpu.pipeline_mode<synchronous>, transform_indices = @transform_3, window_bounds = array<i64: 1, 112>}, {pipeline_mode = #tpu.pipeline_mode<synchronous>, transform_indices = @transform_4, window_bounds = array<i64: 560, 80>}, {pipeline_mode = #tpu.pipeline_mode<synchronous>, transform_indices = @transform_5, window_bounds = array<i64: 560, 80>}, {pipeline_mode = #tpu.pipeline_mode<synchronous>, transform_indices = @transform_6, window_bounds = array<i64: 1, 80>}, {pipeline_mode = #tpu.pipeline_mode<synchronous>, transform_indices = @transform_7, window_bounds = array<i64: 400, 128>}, {pipeline_mode = #tpu.pipeline_mode<synchronous>, transform_indices = @transform_8, window_bounds = array<i64: 1, 128>}, {pipeline_mode = #tpu.pipeline_mode<synchronous>, transform_indices = @transform_9, window_bounds = array<i64: 128, 128>}, {pipeline_mode = #tpu.pipeline_mode<synchronous>, transform_indices = @transform_10, window_bounds = array<i64: 1, 128>}, {pipeline_mode = #tpu.pipeline_mode<synchronous>, transform_indices = @transform_11, window_bounds = array<i64: 128, 128>}, {pipeline_mode = #tpu.pipeline_mode<synchronous>, transform_indices = @transform_12, window_bounds = array<i64: 1, 128>}, {pipeline_mode = #tpu.pipeline_mode<synchronous>, transform_indices = @transform_13, window_bounds = array<i64: 128, 128>}, {pipeline_mode = #tpu.pipeline_mode<synchronous>, transform_indices = @transform_14, window_bounds = array<i64: 1, 128>}, {transform_indices = @transform_15, window_bounds = array<i64: 2, 1>}]} {
    %c0 = arith.constant 0 : index
    %c0_0 = arith.constant 0 : index
    %c0_1 = arith.constant 0 : index
    %c0_2 = arith.constant 0 : index
    %0 = vector.load %arg1[%c0, %c0_0, %c0_1, %c0_2] : memref<4x2x8x96xf32, #tpu.memory_space<vmem>>, vector<4x2x8x96xf32>
    %1 = vector.extract_strided_slice %0 {offsets = [0, 0, 0, 0], sizes = [1, 1, 7, 96], strides = [1, 1, 1, 1]} : vector<4x2x8x96xf32> to vector<1x1x7x96xf32>
    %2 = vector.shape_cast %1 : vector<1x1x7x96xf32> to vector<7x96xf32>
    %3 = vector.extract_strided_slice %0 {offsets = [1, 0, 0, 0], sizes = [1, 1, 7, 96], strides = [1, 1, 1, 1]} : vector<4x2x8x96xf32> to vector<1x1x7x96xf32>
    %4 = vector.shape_cast %3 : vector<1x1x7x96xf32> to vector<7x96xf32>
    %5 = vector.extract_strided_slice %0 {offsets = [2, 0, 0, 0], sizes = [1, 1, 7, 96], strides = [1, 1, 1, 1]} : vector<4x2x8x96xf32> to vector<1x1x7x96xf32>
    %6 = vector.shape_cast %5 : vector<1x1x7x96xf32> to vector<7x96xf32>
    %7 = vector.extract_strided_slice %0 {offsets = [3, 0, 0, 0], sizes = [1, 1, 7, 96], strides = [1, 1, 1, 1]} : vector<4x2x8x96xf32> to vector<1x1x7x96xf32>
    %8 = vector.shape_cast %7 : vector<1x1x7x96xf32> to vector<7x96xf32>
    %9 = vector.extract_strided_slice %0 {offsets = [0, 0, 1, 0], sizes = [1, 1, 7, 96], strides = [1, 1, 1, 1]} : vector<4x2x8x96xf32> to vector<1x1x7x96xf32>
    %10 = vector.shape_cast %9 : vector<1x1x7x96xf32> to vector<7x96xf32>
    %11 = tpu.concatenate %2, %4, %6, %8, %10 in 1 : vector<7x96xf32>, vector<7x96xf32>, vector<7x96xf32>, vector<7x96xf32>, vector<7x96xf32> -> vector<7x480xf32>
    %12 = vector.extract_strided_slice %0 {offsets = [0, 1, 0, 0], sizes = [1, 1, 7, 96], strides = [1, 1, 1, 1]} : vector<4x2x8x96xf32> to vector<1x1x7x96xf32>
    %13 = vector.shape_cast %12 : vector<1x1x7x96xf32> to vector<7x96xf32>
    %14 = vector.extract_strided_slice %0 {offsets = [1, 1, 0, 0], sizes = [1, 1, 7, 96], strides = [1, 1, 1, 1]} : vector<4x2x8x96xf32> to vector<1x1x7x96xf32>
    %15 = vector.shape_cast %14 : vector<1x1x7x96xf32> to vector<7x96xf32>
    %16 = vector.extract_strided_slice %0 {offsets = [2, 1, 0, 0], sizes = [1, 1, 7, 96], strides = [1, 1, 1, 1]} : vector<4x2x8x96xf32> to vector<1x1x7x96xf32>
    %17 = vector.shape_cast %16 : vector<1x1x7x96xf32> to vector<7x96xf32>
    %18 = vector.extract_strided_slice %0 {offsets = [3, 1, 0, 0], sizes = [1, 1, 7, 96], strides = [1, 1, 1, 1]} : vector<4x2x8x96xf32> to vector<1x1x7x96xf32>
    %19 = vector.shape_cast %18 : vector<1x1x7x96xf32> to vector<7x96xf32>
    %20 = vector.extract_strided_slice %0 {offsets = [0, 1, 1, 0], sizes = [1, 1, 7, 96], strides = [1, 1, 1, 1]} : vector<4x2x8x96xf32> to vector<1x1x7x96xf32>
    %21 = vector.shape_cast %20 : vector<1x1x7x96xf32> to vector<7x96xf32>
    %22 = tpu.concatenate %13, %15, %17, %19, %21 in 1 : vector<7x96xf32>, vector<7x96xf32>, vector<7x96xf32>, vector<7x96xf32>, vector<7x96xf32> -> vector<7x480xf32>
    %23 = tpu.concatenate %11, %22 in 0 : vector<7x480xf32>, vector<7x480xf32> -> vector<14x480xf32>
    %24 = vector.extract_strided_slice %0 {offsets = [1, 0, 0, 0], sizes = [1, 1, 7, 96], strides = [1, 1, 1, 1]} : vector<4x2x8x96xf32> to vector<1x1x7x96xf32>
    %25 = vector.shape_cast %24 : vector<1x1x7x96xf32> to vector<7x96xf32>
    %26 = vector.extract_strided_slice %0 {offsets = [2, 0, 0, 0], sizes = [1, 1, 7, 96], strides = [1, 1, 1, 1]} : vector<4x2x8x96xf32> to vector<1x1x7x96xf32>
    %27 = vector.shape_cast %26 : vector<1x1x7x96xf32> to vector<7x96xf32>
    %28 = vector.extract_strided_slice %0 {offsets = [3, 0, 0, 0], sizes = [1, 1, 7, 96], strides = [1, 1, 1, 1]} : vector<4x2x8x96xf32> to vector<1x1x7x96xf32>
    %29 = vector.shape_cast %28 : vector<1x1x7x96xf32> to vector<7x96xf32>
    %30 = vector.extract_strided_slice %0 {offsets = [0, 0, 1, 0], sizes = [1, 1, 7, 96], strides = [1, 1, 1, 1]} : vector<4x2x8x96xf32> to vector<1x1x7x96xf32>
    %31 = vector.shape_cast %30 : vector<1x1x7x96xf32> to vector<7x96xf32>
    %32 = vector.extract_strided_slice %0 {offsets = [1, 0, 1, 0], sizes = [1, 1, 7, 96], strides = [1, 1, 1, 1]} : vector<4x2x8x96xf32> to vector<1x1x7x96xf32>
    %33 = vector.shape_cast %32 : vector<1x1x7x96xf32> to vector<7x96xf32>
    %34 = tpu.concatenate %25, %27, %29, %31, %33 in 1 : vector<7x96xf32>, vector<7x96xf32>, vector<7x96xf32>, vector<7x96xf32>, vector<7x96xf32> -> vector<7x480xf32>
    %35 = vector.extract_strided_slice %0 {offsets = [1, 1, 0, 0], sizes = [1, 1, 7, 96], strides = [1, 1, 1, 1]} : vector<4x2x8x96xf32> to vector<1x1x7x96xf32>
    %36 = vector.shape_cast %35 : vector<1x1x7x96xf32> to vector<7x96xf32>
    %37 = vector.extract_strided_slice %0 {offsets = [2, 1, 0, 0], sizes = [1, 1, 7, 96], strides = [1, 1, 1, 1]} : vector<4x2x8x96xf32> to vector<1x1x7x96xf32>
    %38 = vector.shape_cast %37 : vector<1x1x7x96xf32> to vector<7x96xf32>
    %39 = vector.extract_strided_slice %0 {offsets = [3, 1, 0, 0], sizes = [1, 1, 7, 96], strides = [1, 1, 1, 1]} : vector<4x2x8x96xf32> to vector<1x1x7x96xf32>
    %40 = vector.shape_cast %39 : vector<1x1x7x96xf32> to vector<7x96xf32>
    %41 = vector.extract_strided_slice %0 {offsets = [0, 1, 1, 0], sizes = [1, 1, 7, 96], strides = [1, 1, 1, 1]} : vector<4x2x8x96xf32> to vector<1x1x7x96xf32>
    %42 = vector.shape_cast %41 : vector<1x1x7x96xf32> to vector<7x96xf32>
    %43 = vector.extract_strided_slice %0 {offsets = [1, 1, 1, 0], sizes = [1, 1, 7, 96], strides = [1, 1, 1, 1]} : vector<4x2x8x96xf32> to vector<1x1x7x96xf32>
    %44 = vector.shape_cast %43 : vector<1x1x7x96xf32> to vector<7x96xf32>
    %45 = tpu.concatenate %36, %38, %40, %42, %44 in 1 : vector<7x96xf32>, vector<7x96xf32>, vector<7x96xf32>, vector<7x96xf32>, vector<7x96xf32> -> vector<7x480xf32>
    %46 = tpu.concatenate %34, %45 in 0 : vector<7x480xf32>, vector<7x480xf32> -> vector<14x480xf32>
    %47 = vector.extract_strided_slice %0 {offsets = [2, 0, 0, 0], sizes = [1, 1, 7, 96], strides = [1, 1, 1, 1]} : vector<4x2x8x96xf32> to vector<1x1x7x96xf32>
    %48 = vector.shape_cast %47 : vector<1x1x7x96xf32> to vector<7x96xf32>
    %49 = vector.extract_strided_slice %0 {offsets = [3, 0, 0, 0], sizes = [1, 1, 7, 96], strides = [1, 1, 1, 1]} : vector<4x2x8x96xf32> to vector<1x1x7x96xf32>
    %50 = vector.shape_cast %49 : vector<1x1x7x96xf32> to vector<7x96xf32>
    %51 = vector.extract_strided_slice %0 {offsets = [0, 0, 1, 0], sizes = [1, 1, 7, 96], strides = [1, 1, 1, 1]} : vector<4x2x8x96xf32> to vector<1x1x7x96xf32>
    %52 = vector.shape_cast %51 : vector<1x1x7x96xf32> to vector<7x96xf32>
    %53 = vector.extract_strided_slice %0 {offsets = [1, 0, 1, 0], sizes = [1, 1, 7, 96], strides = [1, 1, 1, 1]} : vector<4x2x8x96xf32> to vector<1x1x7x96xf32>
    %54 = vector.shape_cast %53 : vector<1x1x7x96xf32> to vector<7x96xf32>
    %55 = vector.extract_strided_slice %0 {offsets = [2, 0, 1, 0], sizes = [1, 1, 7, 96], strides = [1, 1, 1, 1]} : vector<4x2x8x96xf32> to vector<1x1x7x96xf32>
    %56 = vector.shape_cast %55 : vector<1x1x7x96xf32> to vector<7x96xf32>
    %57 = tpu.concatenate %48, %50, %52, %54, %56 in 1 : vector<7x96xf32>, vector<7x96xf32>, vector<7x96xf32>, vector<7x96xf32>, vector<7x96xf32> -> vector<7x480xf32>
    %58 = vector.extract_strided_slice %0 {offsets = [2, 1, 0, 0], sizes = [1, 1, 7, 96], strides = [1, 1, 1, 1]} : vector<4x2x8x96xf32> to vector<1x1x7x96xf32>
    %59 = vector.shape_cast %58 : vector<1x1x7x96xf32> to vector<7x96xf32>
    %60 = vector.extract_strided_slice %0 {offsets = [3, 1, 0, 0], sizes = [1, 1, 7, 96], strides = [1, 1, 1, 1]} : vector<4x2x8x96xf32> to vector<1x1x7x96xf32>
    %61 = vector.shape_cast %60 : vector<1x1x7x96xf32> to vector<7x96xf32>
    %62 = vector.extract_strided_slice %0 {offsets = [0, 1, 1, 0], sizes = [1, 1, 7, 96], strides = [1, 1, 1, 1]} : vector<4x2x8x96xf32> to vector<1x1x7x96xf32>
    %63 = vector.shape_cast %62 : vector<1x1x7x96xf32> to vector<7x96xf32>
    %64 = vector.extract_strided_slice %0 {offsets = [1, 1, 1, 0], sizes = [1, 1, 7, 96], strides = [1, 1, 1, 1]} : vector<4x2x8x96xf32> to vector<1x1x7x96xf32>
    %65 = vector.shape_cast %64 : vector<1x1x7x96xf32> to vector<7x96xf32>
    %66 = vector.extract_strided_slice %0 {offsets = [2, 1, 1, 0], sizes = [1, 1, 7, 96], strides = [1, 1, 1, 1]} : vector<4x2x8x96xf32> to vector<1x1x7x96xf32>
    %67 = vector.shape_cast %66 : vector<1x1x7x96xf32> to vector<7x96xf32>
    %68 = tpu.concatenate %59, %61, %63, %65, %67 in 1 : vector<7x96xf32>, vector<7x96xf32>, vector<7x96xf32>, vector<7x96xf32>, vector<7x96xf32> -> vector<7x480xf32>
    %69 = tpu.concatenate %57, %68 in 0 : vector<7x480xf32>, vector<7x480xf32> -> vector<14x480xf32>
    %70 = vector.extract_strided_slice %0 {offsets = [3, 0, 0, 0], sizes = [1, 1, 7, 96], strides = [1, 1, 1, 1]} : vector<4x2x8x96xf32> to vector<1x1x7x96xf32>
    %71 = vector.shape_cast %70 : vector<1x1x7x96xf32> to vector<7x96xf32>
    %72 = vector.extract_strided_slice %0 {offsets = [0, 0, 1, 0], sizes = [1, 1, 7, 96], strides = [1, 1, 1, 1]} : vector<4x2x8x96xf32> to vector<1x1x7x96xf32>
    %73 = vector.shape_cast %72 : vector<1x1x7x96xf32> to vector<7x96xf32>
    %74 = vector.extract_strided_slice %0 {offsets = [1, 0, 1, 0], sizes = [1, 1, 7, 96], strides = [1, 1, 1, 1]} : vector<4x2x8x96xf32> to vector<1x1x7x96xf32>
    %75 = vector.shape_cast %74 : vector<1x1x7x96xf32> to vector<7x96xf32>
    %76 = vector.extract_strided_slice %0 {offsets = [2, 0, 1, 0], sizes = [1, 1, 7, 96], strides = [1, 1, 1, 1]} : vector<4x2x8x96xf32> to vector<1x1x7x96xf32>
    %77 = vector.shape_cast %76 : vector<1x1x7x96xf32> to vector<7x96xf32>
    %78 = vector.extract_strided_slice %0 {offsets = [3, 0, 1, 0], sizes = [1, 1, 7, 96], strides = [1, 1, 1, 1]} : vector<4x2x8x96xf32> to vector<1x1x7x96xf32>
    %79 = vector.shape_cast %78 : vector<1x1x7x96xf32> to vector<7x96xf32>
    %80 = tpu.concatenate %71, %73, %75, %77, %79 in 1 : vector<7x96xf32>, vector<7x96xf32>, vector<7x96xf32>, vector<7x96xf32>, vector<7x96xf32> -> vector<7x480xf32>
    %81 = vector.extract_strided_slice %0 {offsets = [3, 1, 0, 0], sizes = [1, 1, 7, 96], strides = [1, 1, 1, 1]} : vector<4x2x8x96xf32> to vector<1x1x7x96xf32>
    %82 = vector.shape_cast %81 : vector<1x1x7x96xf32> to vector<7x96xf32>
    %83 = vector.extract_strided_slice %0 {offsets = [0, 1, 1, 0], sizes = [1, 1, 7, 96], strides = [1, 1, 1, 1]} : vector<4x2x8x96xf32> to vector<1x1x7x96xf32>
    %84 = vector.shape_cast %83 : vector<1x1x7x96xf32> to vector<7x96xf32>
    %85 = vector.extract_strided_slice %0 {offsets = [1, 1, 1, 0], sizes = [1, 1, 7, 96], strides = [1, 1, 1, 1]} : vector<4x2x8x96xf32> to vector<1x1x7x96xf32>
    %86 = vector.shape_cast %85 : vector<1x1x7x96xf32> to vector<7x96xf32>
    %87 = vector.extract_strided_slice %0 {offsets = [2, 1, 1, 0], sizes = [1, 1, 7, 96], strides = [1, 1, 1, 1]} : vector<4x2x8x96xf32> to vector<1x1x7x96xf32>
    %88 = vector.shape_cast %87 : vector<1x1x7x96xf32> to vector<7x96xf32>
    %89 = vector.extract_strided_slice %0 {offsets = [3, 1, 1, 0], sizes = [1, 1, 7, 96], strides = [1, 1, 1, 1]} : vector<4x2x8x96xf32> to vector<1x1x7x96xf32>
    %90 = vector.shape_cast %89 : vector<1x1x7x96xf32> to vector<7x96xf32>
    %91 = tpu.concatenate %82, %84, %86, %88, %90 in 1 : vector<7x96xf32>, vector<7x96xf32>, vector<7x96xf32>, vector<7x96xf32>, vector<7x96xf32> -> vector<7x480xf32>
    %92 = tpu.concatenate %80, %91 in 0 : vector<7x480xf32>, vector<7x480xf32> -> vector<14x480xf32>
    %93 = tpu.concatenate %23, %46, %69, %92 in 0 : vector<14x480xf32>, vector<14x480xf32>, vector<14x480xf32>, vector<14x480xf32> -> vector<56x480xf32>
    %94 = arith.truncf %93 : vector<56x480xf32> to vector<56x480xbf16>
    %c0_3 = arith.constant 0 : index
    %c0_4 = arith.constant 0 : index
    %95 = vector.load %arg4[%c0_3, %c0_4] : memref<1x112xf32, #tpu.memory_space<vmem>>, vector<1x112xf32>
    %c0_5 = arith.constant 0 : index
    %c0_6 = arith.constant 0 : index
    %96 = vector.load %arg2[%c0_5, %c0_6] : memref<480x112xbf16, #tpu.memory_space<vmem>>, vector<480x112xbf16>
    %cst = arith.constant dense<0.000000e+00> : vector<56x112xf32>
    %97 = tpu.matmul %94, %96, %cst {dimension_numbers = #tpu.dot_dimension_numbers<[1], [0], [0], [1], [0, 0, 1, 1], [], []>} : vector<56x480xbf16>, vector<480x112xbf16>, vector<56x112xf32> -> vector<56x112xf32>
    %98 = vector.broadcast %95 : vector<1x112xf32> to vector<56x112xf32>
    %99 = arith.addf %97, %98 : vector<56x112xf32>
    %c0_7 = arith.constant 0 : index
    %c0_8 = arith.constant 0 : index
    %100 = vector.load %arg3[%c0_7, %c0_8] : memref<480x112xbf16, #tpu.memory_space<vmem>>, vector<480x112xbf16>
    %cst_9 = arith.constant dense<0.000000e+00> : vector<56x112xf32>
    %101 = tpu.matmul %94, %100, %cst_9 {dimension_numbers = #tpu.dot_dimension_numbers<[1], [0], [0], [1], [0, 0, 1, 1], [], []>} : vector<56x480xbf16>, vector<480x112xbf16>, vector<56x112xf32> -> vector<56x112xf32>
    %102 = vector.broadcast %95 : vector<1x112xf32> to vector<56x112xf32>
    %103 = arith.addf %101, %102 : vector<56x112xf32>
    %104 = arith.maximumf %99, %103 : vector<56x112xf32>
    %cst_10 = arith.constant 0.000000e+00 : f32
    %105 = vector.broadcast %cst_10 : f32 to vector<56x112xf32>
    %106 = arith.maximumf %104, %105 : vector<56x112xf32>
    %107 = vector.extract_strided_slice %106 {offsets = [0, 0], sizes = [14, 112], strides = [1, 1]} : vector<56x112xf32> to vector<14x112xf32>
    %108 = vector.extract_strided_slice %106 {offsets = [14, 0], sizes = [14, 112], strides = [1, 1]} : vector<56x112xf32> to vector<14x112xf32>
    %109 = arith.maximumf %107, %108 : vector<14x112xf32>
    %110 = vector.extract_strided_slice %106 {offsets = [28, 0], sizes = [14, 112], strides = [1, 1]} : vector<56x112xf32> to vector<14x112xf32>
    %111 = vector.extract_strided_slice %106 {offsets = [42, 0], sizes = [14, 112], strides = [1, 1]} : vector<56x112xf32> to vector<14x112xf32>
    %112 = arith.maximumf %110, %111 : vector<14x112xf32>
    %113 = vector.extract_strided_slice %109 {offsets = [0, 0], sizes = [5, 112], strides = [1, 1]} : vector<14x112xf32> to vector<5x112xf32>
    %114 = vector.extract_strided_slice %112 {offsets = [0, 0], sizes = [5, 112], strides = [1, 1]} : vector<14x112xf32> to vector<5x112xf32>
    %115 = vector.extract_strided_slice %109 {offsets = [1, 0], sizes = [5, 112], strides = [1, 1]} : vector<14x112xf32> to vector<5x112xf32>
    %116 = vector.extract_strided_slice %112 {offsets = [1, 0], sizes = [5, 112], strides = [1, 1]} : vector<14x112xf32> to vector<5x112xf32>
    %117 = vector.extract_strided_slice %109 {offsets = [2, 0], sizes = [5, 112], strides = [1, 1]} : vector<14x112xf32> to vector<5x112xf32>
    %118 = tpu.concatenate %113, %114, %115, %116, %117 in 1 : vector<5x112xf32>, vector<5x112xf32>, vector<5x112xf32>, vector<5x112xf32>, vector<5x112xf32> -> vector<5x560xf32>
    %119 = vector.extract_strided_slice %109 {offsets = [7, 0], sizes = [5, 112], strides = [1, 1]} : vector<14x112xf32> to vector<5x112xf32>
    %120 = vector.extract_strided_slice %112 {offsets = [7, 0], sizes = [5, 112], strides = [1, 1]} : vector<14x112xf32> to vector<5x112xf32>
    %121 = vector.extract_strided_slice %109 {offsets = [8, 0], sizes = [5, 112], strides = [1, 1]} : vector<14x112xf32> to vector<5x112xf32>
    %122 = vector.extract_strided_slice %112 {offsets = [8, 0], sizes = [5, 112], strides = [1, 1]} : vector<14x112xf32> to vector<5x112xf32>
    %123 = vector.extract_strided_slice %109 {offsets = [9, 0], sizes = [5, 112], strides = [1, 1]} : vector<14x112xf32> to vector<5x112xf32>
    %124 = tpu.concatenate %119, %120, %121, %122, %123 in 1 : vector<5x112xf32>, vector<5x112xf32>, vector<5x112xf32>, vector<5x112xf32>, vector<5x112xf32> -> vector<5x560xf32>
    %125 = tpu.concatenate %118, %124 in 0 : vector<5x560xf32>, vector<5x560xf32> -> vector<10x560xf32>
    %126 = vector.extract_strided_slice %112 {offsets = [0, 0], sizes = [5, 112], strides = [1, 1]} : vector<14x112xf32> to vector<5x112xf32>
    %127 = vector.extract_strided_slice %109 {offsets = [1, 0], sizes = [5, 112], strides = [1, 1]} : vector<14x112xf32> to vector<5x112xf32>
    %128 = vector.extract_strided_slice %112 {offsets = [1, 0], sizes = [5, 112], strides = [1, 1]} : vector<14x112xf32> to vector<5x112xf32>
    %129 = vector.extract_strided_slice %109 {offsets = [2, 0], sizes = [5, 112], strides = [1, 1]} : vector<14x112xf32> to vector<5x112xf32>
    %130 = vector.extract_strided_slice %112 {offsets = [2, 0], sizes = [5, 112], strides = [1, 1]} : vector<14x112xf32> to vector<5x112xf32>
    %131 = tpu.concatenate %126, %127, %128, %129, %130 in 1 : vector<5x112xf32>, vector<5x112xf32>, vector<5x112xf32>, vector<5x112xf32>, vector<5x112xf32> -> vector<5x560xf32>
    %132 = vector.extract_strided_slice %112 {offsets = [7, 0], sizes = [5, 112], strides = [1, 1]} : vector<14x112xf32> to vector<5x112xf32>
    %133 = vector.extract_strided_slice %109 {offsets = [8, 0], sizes = [5, 112], strides = [1, 1]} : vector<14x112xf32> to vector<5x112xf32>
    %134 = vector.extract_strided_slice %112 {offsets = [8, 0], sizes = [5, 112], strides = [1, 1]} : vector<14x112xf32> to vector<5x112xf32>
    %135 = vector.extract_strided_slice %109 {offsets = [9, 0], sizes = [5, 112], strides = [1, 1]} : vector<14x112xf32> to vector<5x112xf32>
    %136 = vector.extract_strided_slice %112 {offsets = [9, 0], sizes = [5, 112], strides = [1, 1]} : vector<14x112xf32> to vector<5x112xf32>
    %137 = tpu.concatenate %132, %133, %134, %135, %136 in 1 : vector<5x112xf32>, vector<5x112xf32>, vector<5x112xf32>, vector<5x112xf32>, vector<5x112xf32> -> vector<5x560xf32>
    %138 = tpu.concatenate %131, %137 in 0 : vector<5x560xf32>, vector<5x560xf32> -> vector<10x560xf32>
    %139 = tpu.concatenate %125, %138 in 0 : vector<10x560xf32>, vector<10x560xf32> -> vector<20x560xf32>
    %140 = arith.truncf %139 : vector<20x560xf32> to vector<20x560xbf16>
    %c0_11 = arith.constant 0 : index
    %c0_12 = arith.constant 0 : index
    %141 = vector.load %arg7[%c0_11, %c0_12] : memref<1x80xf32, #tpu.memory_space<vmem>>, vector<1x80xf32>
    %c0_13 = arith.constant 0 : index
    %c0_14 = arith.constant 0 : index
    %142 = vector.load %arg5[%c0_13, %c0_14] : memref<560x80xbf16, #tpu.memory_space<vmem>>, vector<560x80xbf16>
    %cst_15 = arith.constant dense<0.000000e+00> : vector<20x80xf32>
    %143 = tpu.matmul %140, %142, %cst_15 {dimension_numbers = #tpu.dot_dimension_numbers<[1], [0], [0], [1], [0, 0, 1, 1], [], []>} : vector<20x560xbf16>, vector<560x80xbf16>, vector<20x80xf32> -> vector<20x80xf32>
    %144 = vector.broadcast %141 : vector<1x80xf32> to vector<20x80xf32>
    %145 = arith.addf %143, %144 : vector<20x80xf32>
    %c0_16 = arith.constant 0 : index
    %c0_17 = arith.constant 0 : index
    %146 = vector.load %arg6[%c0_16, %c0_17] : memref<560x80xbf16, #tpu.memory_space<vmem>>, vector<560x80xbf16>
    %cst_18 = arith.constant dense<0.000000e+00> : vector<20x80xf32>
    %147 = tpu.matmul %140, %146, %cst_18 {dimension_numbers = #tpu.dot_dimension_numbers<[1], [0], [0], [1], [0, 0, 1, 1], [], []>} : vector<20x560xbf16>, vector<560x80xbf16>, vector<20x80xf32> -> vector<20x80xf32>
    %148 = vector.broadcast %141 : vector<1x80xf32> to vector<20x80xf32>
    %149 = arith.addf %147, %148 : vector<20x80xf32>
    %150 = arith.maximumf %145, %149 : vector<20x80xf32>
    %cst_19 = arith.constant 0.000000e+00 : f32
    %151 = vector.broadcast %cst_19 : f32 to vector<20x80xf32>
    %152 = arith.maximumf %150, %151 : vector<20x80xf32>
    %153 = vector.extract_strided_slice %152 {offsets = [0, 0], sizes = [10, 80], strides = [1, 1]} : vector<20x80xf32> to vector<10x80xf32>
    %154 = vector.extract_strided_slice %152 {offsets = [10, 0], sizes = [10, 80], strides = [1, 1]} : vector<20x80xf32> to vector<10x80xf32>
    %155 = arith.maximumf %153, %154 : vector<10x80xf32>
    %156 = vector.extract_strided_slice %155 {offsets = [0, 0], sizes = [1, 80], strides = [1, 1]} : vector<10x80xf32> to vector<1x80xf32>
    %157 = vector.extract_strided_slice %155 {offsets = [1, 0], sizes = [1, 80], strides = [1, 1]} : vector<10x80xf32> to vector<1x80xf32>
    %158 = vector.extract_strided_slice %155 {offsets = [2, 0], sizes = [1, 80], strides = [1, 1]} : vector<10x80xf32> to vector<1x80xf32>
    %159 = vector.extract_strided_slice %155 {offsets = [3, 0], sizes = [1, 80], strides = [1, 1]} : vector<10x80xf32> to vector<1x80xf32>
    %160 = vector.extract_strided_slice %155 {offsets = [4, 0], sizes = [1, 80], strides = [1, 1]} : vector<10x80xf32> to vector<1x80xf32>
    %161 = tpu.concatenate %156, %157, %158, %159, %160 in 1 : vector<1x80xf32>, vector<1x80xf32>, vector<1x80xf32>, vector<1x80xf32>, vector<1x80xf32> -> vector<1x400xf32>
    %162 = vector.extract_strided_slice %155 {offsets = [5, 0], sizes = [1, 80], strides = [1, 1]} : vector<10x80xf32> to vector<1x80xf32>
    %163 = vector.extract_strided_slice %155 {offsets = [6, 0], sizes = [1, 80], strides = [1, 1]} : vector<10x80xf32> to vector<1x80xf32>
    %164 = vector.extract_strided_slice %155 {offsets = [7, 0], sizes = [1, 80], strides = [1, 1]} : vector<10x80xf32> to vector<1x80xf32>
    %165 = vector.extract_strided_slice %155 {offsets = [8, 0], sizes = [1, 80], strides = [1, 1]} : vector<10x80xf32> to vector<1x80xf32>
    %166 = vector.extract_strided_slice %155 {offsets = [9, 0], sizes = [1, 80], strides = [1, 1]} : vector<10x80xf32> to vector<1x80xf32>
    %167 = tpu.concatenate %162, %163, %164, %165, %166 in 1 : vector<1x80xf32>, vector<1x80xf32>, vector<1x80xf32>, vector<1x80xf32>, vector<1x80xf32> -> vector<1x400xf32>
    %168 = tpu.concatenate %161, %167 in 0 : vector<1x400xf32>, vector<1x400xf32> -> vector<2x400xf32>
    %169 = arith.truncf %168 : vector<2x400xf32> to vector<2x400xbf16>
    %c0_20 = arith.constant 0 : index
    %c0_21 = arith.constant 0 : index
    %170 = vector.load %arg8[%c0_20, %c0_21] : memref<400x128xbf16, #tpu.memory_space<vmem>>, vector<400x128xbf16>
    %cst_22 = arith.constant dense<0.000000e+00> : vector<2x128xf32>
    %171 = tpu.matmul %169, %170, %cst_22 {dimension_numbers = #tpu.dot_dimension_numbers<[1], [0], [0], [1], [0, 0, 1, 1], [], []>} : vector<2x400xbf16>, vector<400x128xbf16>, vector<2x128xf32> -> vector<2x128xf32>
    %c0_23 = arith.constant 0 : index
    %c0_24 = arith.constant 0 : index
    %172 = vector.load %arg9[%c0_23, %c0_24] : memref<1x128xf32, #tpu.memory_space<vmem>>, vector<1x128xf32>
    %173 = vector.broadcast %172 : vector<1x128xf32> to vector<2x128xf32>
    %174 = arith.addf %171, %173 : vector<2x128xf32>
    %cst_25 = arith.constant 0.000000e+00 : f32
    %175 = vector.broadcast %cst_25 : f32 to vector<2x128xf32>
    %176 = arith.maximumf %174, %175 : vector<2x128xf32>
    %177 = arith.truncf %176 : vector<2x128xf32> to vector<2x128xbf16>
    %c0_26 = arith.constant 0 : index
    %c0_27 = arith.constant 0 : index
    %178 = vector.load %arg10[%c0_26, %c0_27] : memref<128x128xbf16, #tpu.memory_space<vmem>>, vector<128x128xbf16>
    %cst_28 = arith.constant dense<0.000000e+00> : vector<2x128xf32>
    %179 = tpu.matmul %177, %178, %cst_28 {dimension_numbers = #tpu.dot_dimension_numbers<[1], [0], [0], [1], [0, 0, 1, 1], [], []>} : vector<2x128xbf16>, vector<128x128xbf16>, vector<2x128xf32> -> vector<2x128xf32>
    %c0_29 = arith.constant 0 : index
    %c0_30 = arith.constant 0 : index
    %180 = vector.load %arg11[%c0_29, %c0_30] : memref<1x128xf32, #tpu.memory_space<vmem>>, vector<1x128xf32>
    %181 = vector.broadcast %180 : vector<1x128xf32> to vector<2x128xf32>
    %182 = arith.addf %179, %181 : vector<2x128xf32>
    %cst_31 = arith.constant 0.000000e+00 : f32
    %183 = vector.broadcast %cst_31 : f32 to vector<2x128xf32>
    %184 = arith.maximumf %182, %183 : vector<2x128xf32>
    %185 = arith.truncf %184 : vector<2x128xf32> to vector<2x128xbf16>
    %c0_32 = arith.constant 0 : index
    %c0_33 = arith.constant 0 : index
    %186 = vector.load %arg12[%c0_32, %c0_33] : memref<128x128xbf16, #tpu.memory_space<vmem>>, vector<128x128xbf16>
    %cst_34 = arith.constant dense<0.000000e+00> : vector<2x128xf32>
    %187 = tpu.matmul %185, %186, %cst_34 {dimension_numbers = #tpu.dot_dimension_numbers<[1], [0], [0], [1], [0, 0, 1, 1], [], []>} : vector<2x128xbf16>, vector<128x128xbf16>, vector<2x128xf32> -> vector<2x128xf32>
    %c0_35 = arith.constant 0 : index
    %c0_36 = arith.constant 0 : index
    %188 = vector.load %arg13[%c0_35, %c0_36] : memref<1x128xf32, #tpu.memory_space<vmem>>, vector<1x128xf32>
    %189 = vector.broadcast %188 : vector<1x128xf32> to vector<2x128xf32>
    %190 = arith.addf %187, %189 : vector<2x128xf32>
    %cst_37 = arith.constant 0.000000e+00 : f32
    %191 = vector.broadcast %cst_37 : f32 to vector<2x128xf32>
    %192 = arith.maximumf %190, %191 : vector<2x128xf32>
    %193 = arith.truncf %192 : vector<2x128xf32> to vector<2x128xbf16>
    %c0_38 = arith.constant 0 : index
    %c0_39 = arith.constant 0 : index
    %194 = vector.load %arg14[%c0_38, %c0_39] : memref<128x128xbf16, #tpu.memory_space<vmem>>, vector<128x128xbf16>
    %cst_40 = arith.constant dense<0.000000e+00> : vector<2x128xf32>
    %195 = tpu.matmul %193, %194, %cst_40 {dimension_numbers = #tpu.dot_dimension_numbers<[1], [0], [0], [1], [0, 0, 1, 1], [], []>} : vector<2x128xbf16>, vector<128x128xbf16>, vector<2x128xf32> -> vector<2x128xf32>
    %c0_41 = arith.constant 0 : index
    %c0_42 = arith.constant 0 : index
    %196 = vector.load %arg15[%c0_41, %c0_42] : memref<1x128xf32, #tpu.memory_space<vmem>>, vector<1x128xf32>
    %197 = vector.broadcast %196 : vector<1x128xf32> to vector<2x128xf32>
    %198 = arith.addf %195, %197 : vector<2x128xf32>
    %199 = vector.extract_strided_slice %198 {offsets = [0, 0], sizes = [2, 1], strides = [1, 1]} : vector<2x128xf32> to vector<2x1xf32>
    %c0_43 = arith.constant 0 : index
    %c0_44 = arith.constant 0 : index
    %200 = vector.load %arg16[%c0_43, %c0_44] : memref<2x1xf32, #tpu.memory_space<vmem>>, vector<2x1xf32>
    tpu.vector_store %arg16[%c0_43, %c0_44], %199 {strides = array<i32>} : memref<2x1xf32, #tpu.memory_space<vmem>>, vector<2x1xf32>,
    return
  }
  func.func @transform_0(%arg0: i32) -> (i32, i32, i32, i32) {
    %c0_i32 = arith.constant 0 : i32
    %c0_i32_0 = arith.constant 0 : i32
    %c0_i32_1 = arith.constant 0 : i32
    %c0_i32_2 = arith.constant 0 : i32
    return %c0_i32, %arg0, %c0_i32_0, %c0_i32_1 : i32, i32, i32, i32
  }
  func.func @transform_1(%arg0: i32) -> (i32, i32) {
    %c0_i32 = arith.constant 0 : i32
    %c0_i32_0 = arith.constant 0 : i32
    %c0_i32_1 = arith.constant 0 : i32
    return %c0_i32, %c0_i32_0 : i32, i32
  }
  func.func @transform_2(%arg0: i32) -> (i32, i32) {
    %c0_i32 = arith.constant 0 : i32
    %c0_i32_0 = arith.constant 0 : i32
    %c0_i32_1 = arith.constant 0 : i32
    return %c0_i32, %c0_i32_0 : i32, i32
  }
  func.func @transform_3(%arg0: i32) -> (i32, i32) {
    %c0_i32 = arith.constant 0 : i32
    %c0_i32_0 = arith.constant 0 : i32
    %c0_i32_1 = arith.constant 0 : i32
    return %c0_i32, %c0_i32_0 : i32, i32
  }
  func.func @transform_4(%arg0: i32) -> (i32, i32) {
    %c0_i32 = arith.constant 0 : i32
    %c0_i32_0 = arith.constant 0 : i32
    %c0_i32_1 = arith.constant 0 : i32
    return %c0_i32, %c0_i32_0 : i32, i32
  }
  func.func @transform_5(%arg0: i32) -> (i32, i32) {
    %c0_i32 = arith.constant 0 : i32
    %c0_i32_0 = arith.constant 0 : i32
    %c0_i32_1 = arith.constant 0 : i32
    return %c0_i32, %c0_i32_0 : i32, i32
  }
  func.func @transform_6(%arg0: i32) -> (i32, i32) {
    %c0_i32 = arith.constant 0 : i32
    %c0_i32_0 = arith.constant 0 : i32
    %c0_i32_1 = arith.constant 0 : i32
    return %c0_i32, %c0_i32_0 : i32, i32
  }
  func.func @transform_7(%arg0: i32) -> (i32, i32) {
    %c0_i32 = arith.constant 0 : i32
    %c0_i32_0 = arith.constant 0 : i32
    %c0_i32_1 = arith.constant 0 : i32
    return %c0_i32, %c0_i32_0 : i32, i32
  }
  func.func @transform_8(%arg0: i32) -> (i32, i32) {
    %c0_i32 = arith.constant 0 : i32
    %c0_i32_0 = arith.constant 0 : i32
    %c0_i32_1 = arith.constant 0 : i32
    return %c0_i32, %c0_i32_0 : i32, i32
  }
  func.func @transform_9(%arg0: i32) -> (i32, i32) {
    %c0_i32 = arith.constant 0 : i32
    %c0_i32_0 = arith.constant 0 : i32
    %c0_i32_1 = arith.constant 0 : i32
    return %c0_i32, %c0_i32_0 : i32, i32
  }
  func.func @transform_10(%arg0: i32) -> (i32, i32) {
    %c0_i32 = arith.constant 0 : i32
    %c0_i32_0 = arith.constant 0 : i32
    %c0_i32_1 = arith.constant 0 : i32
    return %c0_i32, %c0_i32_0 : i32, i32
  }
  func.func @transform_11(%arg0: i32) -> (i32, i32) {
    %c0_i32 = arith.constant 0 : i32
    %c0_i32_0 = arith.constant 0 : i32
    %c0_i32_1 = arith.constant 0 : i32
    return %c0_i32, %c0_i32_0 : i32, i32
  }
  func.func @transform_12(%arg0: i32) -> (i32, i32) {
    %c0_i32 = arith.constant 0 : i32
    %c0_i32_0 = arith.constant 0 : i32
    %c0_i32_1 = arith.constant 0 : i32
    return %c0_i32, %c0_i32_0 : i32, i32
  }
  func.func @transform_13(%arg0: i32) -> (i32, i32) {
    %c0_i32 = arith.constant 0 : i32
    %c0_i32_0 = arith.constant 0 : i32
    %c0_i32_1 = arith.constant 0 : i32
    return %c0_i32, %c0_i32_0 : i32, i32
  }
  func.func @transform_14(%arg0: i32) -> (i32, i32) {
    %c0_i32 = arith.constant 0 : i32
    %c0_i32_0 = arith.constant 0 : i32
    %c0_i32_1 = arith.constant 0 : i32
    return %c0_i32, %c0_i32_0 : i32, i32
  }
  func.func @transform_15(%arg0: i32) -> (i32, i32) {
    %c0_i32 = arith.constant 0 : i32
    %c0_i32_0 = arith.constant 0 : i32
    return %arg0, %c0_i32 : i32, i32
  }
}

</mosaic_0001>

<llo_original>
// kernel: net_forward.1
$region0: #{net_forward.1}
  #allocation0 [shape = 'u32[]', space=smem, size = 0x4, offset = 0x4, fixed_abs, tag = 'smem constant byte address 0x4 - core index']
  #allocation1 [shape = 'u32[144,128]{1,0:T(1,128)}', space=vmem, size = 0x12000, scoped, tag = 'internal scratch']
  %s0 = inlined_call_operand.vmem [shape: f32[4,2,8,96], index: 0, kind: input, shape index: {}]
  %s1 = inlined_call_operand.vmem [shape: bf16[480,112], index: 1, kind: input, shape index: {}]
  %s2 = inlined_call_operand.vmem [shape: bf16[480,112], index: 2, kind: input, shape index: {}]
  %s3 = inlined_call_operand.vmem [shape: f32[1,112], index: 3, kind: input, shape index: {}]
  %s4 = inlined_call_operand.vmem [shape: bf16[560,80], index: 4, kind: input, shape index: {}]
  %s5 = inlined_call_operand.vmem [shape: bf16[560,80], index: 5, kind: input, shape index: {}]
  %s6 = inlined_call_operand.vmem [shape: f32[1,80], index: 6, kind: input, shape index: {}]
  %s7 = inlined_call_operand.vmem [shape: bf16[400,128], index: 7, kind: input, shape index: {}]
  %s8 = inlined_call_operand.vmem [shape: f32[1,128], index: 8, kind: input, shape index: {}]
  %s9 = inlined_call_operand.vmem [shape: bf16[128,128], index: 9, kind: input, shape index: {}]
  %s10 = inlined_call_operand.vmem [shape: f32[1,128], index: 10, kind: input, shape index: {}]
  %s11 = inlined_call_operand.vmem [shape: bf16[128,128], index: 11, kind: input, shape index: {}]
  %s12 = inlined_call_operand.vmem [shape: f32[1,128], index: 12, kind: input, shape index: {}]
  %s13 = inlined_call_operand.vmem [shape: bf16[128,128], index: 13, kind: input, shape index: {}]
  %s14 = inlined_call_operand.vmem [shape: f32[1,128], index: 14, kind: input, shape index: {}]
  %s15 = inlined_call_operand.vmem [shape: f32[2,1], index: 15, kind: output, shape index: {}]
  %s16 = sld [smem:[#allocation0]]
  $region70: #{net_forward.1} parent=0
    _
  %s18 = ssub.s32 1, %s16
  %s19 = scalar_select 0, %s18, %s16
  // Predicated region
  $region2: #{net_forward.1} parent=0 // pred_check
    _
  $region3: #{net_forward.1} parent=0 // pred_check_branch
    %21 = sbr.rel (0) target = $region5
  $region4: #{net_forward.1} parent=0 // pred_region
    _
  $region5: #{net_forward.1} parent=0 // pred_fallthru
    _
  // Predicated region
  $region6: #{net_forward.1} parent=0 // pred_check
    _
  $region7: #{net_forward.1} parent=0 // pred_check_branch
    %23 = sbr.rel (0) target = $region9
  $region8: #{net_forward.1} parent=0 // pred_region
    _
  $region9: #{net_forward.1} parent=0 // pred_fallthru
    _
  // Predicated region
  $region10: #{net_forward.1} parent=0 // pred_check
    _
  $region11: #{net_forward.1} parent=0 // pred_check_branch
    %25 = sbr.rel (0) target = $region13
  $region12: #{net_forward.1} parent=0 // pred_region
    _
  $region13: #{net_forward.1} parent=0 // pred_fallthru
    _
  // Predicated region
  $region14: #{net_forward.1} parent=0 // pred_check
    _
  $region15: #{net_forward.1} parent=0 // pred_check_branch
    %27 = sbr.rel (0) target = $region17
  $region16: #{net_forward.1} parent=0 // pred_region
    _
  $region17: #{net_forward.1} parent=0 // pred_fallthru
    _
  // Predicated region
  $region18: #{net_forward.1} parent=0 // pred_check
    _
  $region19: #{net_forward.1} parent=0 // pred_check_branch
    %29 = sbr.rel (0) target = $region21
  $region20: #{net_forward.1} parent=0 // pred_region
    _
  $region21: #{net_forward.1} parent=0 // pred_fallthru
    _
  // Predicated region
  $region22: #{net_forward.1} parent=0 // pred_check
    _
  $region23: #{net_forward.1} parent=0 // pred_check_branch
    %31 = sbr.rel (0) target = $region25
  $region24: #{net_forward.1} parent=0 // pred_region
    _
  $region25: #{net_forward.1} parent=0 // pred_fallthru
    _
  // Predicated region
  $region26: #{net_forward.1} parent=0 // pred_check
    _
  $region27: #{net_forward.1} parent=0 // pred_check_branch
    %33 = sbr.rel (0) target = $region29
  $region28: #{net_forward.1} parent=0 // pred_region
    _
  $region29: #{net_forward.1} parent=0 // pred_fallthru
    _
  // Predicated region
  $region30: #{net_forward.1} parent=0 // pred_check
    _
  $region31: #{net_forward.1} parent=0 // pred_check_branch
    %35 = sbr.rel (0) target = $region33
  $region32: #{net_forward.1} parent=0 // pred_region
    _
  $region33: #{net_forward.1} parent=0 // pred_fallthru
    _
  // Predicated region
  $region34: #{net_forward.1} parent=0 // pred_check
    _
  $region35: #{net_forward.1} parent=0 // pred_check_branch
    %37 = sbr.rel (0) target = $region37
  $region36: #{net_forward.1} parent=0 // pred_region
    _
  $region37: #{net_forward.1} parent=0 // pred_fallthru
    _
  // Predicated region
  $region38: #{net_forward.1} parent=0 // pred_check
    _
  $region39: #{net_forward.1} parent=0 // pred_check_branch
    %39 = sbr.rel (0) target = $region41
  $region40: #{net_forward.1} parent=0 // pred_region
    _
  $region41: #{net_forward.1} parent=0 // pred_fallthru
    _
  // Predicated region
  $region42: #{net_forward.1} parent=0 // pred_check
    _
  $region43: #{net_forward.1} parent=0 // pred_check_branch
    %41 = sbr.rel (0) target = $region45
  $region44: #{net_forward.1} parent=0 // pred_region
    _
  $region45: #{net_forward.1} parent=0 // pred_fallthru
    _
  // Predicated region
  $region46: #{net_forward.1} parent=0 // pred_check
    _
  $region47: #{net_forward.1} parent=0 // pred_check_branch
    %43 = sbr.rel (0) target = $region49
  $region48: #{net_forward.1} parent=0 // pred_region
    _
  $region49: #{net_forward.1} parent=0 // pred_fallthru
    _
  // Predicated region
  $region50: #{net_forward.1} parent=0 // pred_check
    _
  $region51: #{net_forward.1} parent=0 // pred_check_branch
    %45 = sbr.rel (0) target = $region53
  $region52: #{net_forward.1} parent=0 // pred_region
    _
  $region53: #{net_forward.1} parent=0 // pred_fallthru
    _
  // Predicated region
  $region54: #{net_forward.1} parent=0 // pred_check
    _
  $region55: #{net_forward.1} parent=0 // pred_check_branch
    %47 = sbr.rel (0) target = $region57
  $region56: #{net_forward.1} parent=0 // pred_region
    _
  $region57: #{net_forward.1} parent=0 // pred_fallthru
    _
  // Predicated region
  $region58: #{net_forward.1} parent=0 // pred_check
    _
  $region59: #{net_forward.1} parent=0 // pred_check_branch
    %49 = sbr.rel (0) target = $region61
  $region60: #{net_forward.1} parent=0 // pred_region
    _
  $region61: #{net_forward.1} parent=0 // pred_fallthru
    _
  %v51 = vld [vmem:[%s0] sm:$0xff]
  %v52 = vld [vmem:[%s0 + $0x8] sm:$0xff]
  %v53 = vld [vmem:[%s0 + $0x10] sm:$0xff]
  %v54 = vld [vmem:[%s0 + $0x18] sm:$0xff]
  %v55 = vld [vmem:[%s0 + $0x20] sm:$0xff]
  %v56 = vld [vmem:[%s0 + $0x28] sm:$0xff]
  %v57 = vld [vmem:[%s0 + $0x30] sm:$0xff]
  %v58 = vld [vmem:[%s0 + $0x38] sm:$0xff]
  %60 = vrot.lane.b32.xlu0 %v53, 96
  %v61 = vpop.permute.xlu0 %60
  %64 = vrot.lane.b32.xlu0 %v55, 64
  %v65 = vpop.permute.xlu0 %64
  %68 = vrot.lane.b32.xlu0 %v57, 32
  %v69 = vpop.permute.xlu0 %68
  %v72 = vrot.slane %v51, 1
  %vm74 = vcmask 785408
  %v75 = vsel %vm74, %v51, %v61
  %vm76 = vcmask 523264
  %v77 = vsel %vm76, %v61, %v65
  %vm78 = vcmask 261120
  %v79 = vsel %vm78, %v65, %v69
  %81 = vrot.lane.b32.xlu0 %v54, 96
  %v82 = vpop.permute.xlu0 %81
  %85 = vrot.lane.b32.xlu0 %v56, 64
  %v86 = vpop.permute.xlu0 %85
  %89 = vrot.lane.b32.xlu0 %v58, 32
  %v90 = vpop.permute.xlu0 %89
  %v93 = vrot.slane %v52, 1
  %v94 = vsel %vm74, %v52, %v82
  %v95 = vsel %vm76, %v82, %v86
  %v96 = vsel %vm78, %v86, %v90
  %v100 = vrot.slane %v94, 1
  %v101 = vrot.slane %v95, 1
  %v102 = vrot.slane %v96, 1
  %v103 = vrot.slane %v93, 1
  %vm108 = vcmask 1046528
  %v109 = vsel %vm108, %v75, %v100
  %v110 = vsel %vm108, %v77, %v101
  %v111 = vsel %vm108, %v79, %v102
  %v112 = vsel %vm108, %v72, %v103
  %113 = vrot.lane.b32.xlu0 %v55, 96
  %v114 = vpop.permute.xlu0 %113
  %116 = vrot.lane.b32.xlu0 %v57, 64
  %v117 = vpop.permute.xlu0 %116
  %119 = vrot.lane.b32.xlu0 %v72, 32
  %v120 = vpop.permute.xlu0 %119
  %v122 = vrot.slane %v53, 1
  %v124 = vsel %vm74, %v53, %v114
  %v125 = vsel %vm76, %v114, %v117
  %v126 = vsel %vm78, %v117, %v120
  %127 = vrot.lane.b32.xlu0 %v56, 96
  %v128 = vpop.permute.xlu0 %127
  %130 = vrot.lane.b32.xlu0 %v58, 64
  %v131 = vpop.permute.xlu0 %130
  %133 = vrot.lane.b32.xlu0 %v93, 32
  %v134 = vpop.permute.xlu0 %133
  %v136 = vrot.slane %v54, 1
  %v137 = vsel %vm74, %v54, %v128
  %v138 = vsel %vm76, %v128, %v131
  %v139 = vsel %vm78, %v131, %v134
  %v143 = vrot.slane %v137, 1
  %v144 = vrot.slane %v138, 1
  %v145 = vrot.slane %v139, 1
  %v146 = vrot.slane %v136, 1
  %v151 = vsel %vm108, %v124, %v143
  %v152 = vsel %vm108, %v125, %v144
  %v153 = vsel %vm108, %v126, %v145
  %v154 = vsel %vm108, %v122, %v146
  %155 = vrot.lane.b32.xlu0 %v57, 96
  %v156 = vpop.permute.xlu0 %155
  %158 = vrot.lane.b32.xlu0 %v72, 64
  %v159 = vpop.permute.xlu0 %158
  %161 = vrot.lane.b32.xlu0 %v122, 32
  %v162 = vpop.permute.xlu0 %161
  %v164 = vrot.slane %v55, 1
  %v166 = vsel %vm74, %v55, %v156
  %v167 = vsel %vm76, %v156, %v159
  %v168 = vsel %vm78, %v159, %v162
  %169 = vrot.lane.b32.xlu0 %v58, 96
  %v170 = vpop.permute.xlu0 %169
  %172 = vrot.lane.b32.xlu0 %v93, 64
  %v173 = vpop.permute.xlu0 %172
  %175 = vrot.lane.b32.xlu0 %v136, 32
  %v176 = vpop.permute.xlu0 %175
  %v178 = vrot.slane %v56, 1
  %v179 = vsel %vm74, %v56, %v170
  %v180 = vsel %vm76, %v170, %v173
  %v181 = vsel %vm78, %v173, %v176
  %v185 = vrot.slane %v179, 1
  %v186 = vrot.slane %v180, 1
  %v187 = vrot.slane %v181, 1
  %v188 = vrot.slane %v178, 1
  %v193 = vsel %vm108, %v166, %v185
  %v194 = vsel %vm108, %v167, %v186
  %v195 = vsel %vm108, %v168, %v187
  %v196 = vsel %vm108, %v164, %v188
  %197 = vrot.lane.b32.xlu0 %v72, 96
  %v198 = vpop.permute.xlu0 %197
  %200 = vrot.lane.b32.xlu0 %v122, 64
  %v201 = vpop.permute.xlu0 %200
  %203 = vrot.lane.b32.xlu0 %v164, 32
  %v204 = vpop.permute.xlu0 %203
  %v206 = vrot.slane %v57, 1
  %v208 = vsel %vm74, %v57, %v198
  %v209 = vsel %vm76, %v198, %v201
  %v210 = vsel %vm78, %v201, %v204
  %211 = vrot.lane.b32.xlu0 %v93, 96
  %v212 = vpop.permute.xlu0 %211
  %214 = vrot.lane.b32.xlu0 %v136, 64
  %v215 = vpop.permute.xlu0 %214
  %217 = vrot.lane.b32.xlu0 %v178, 32
  %v218 = vpop.permute.xlu0 %217
  %v220 = vrot.slane %v58, 1
  %v221 = vsel %vm74, %v58, %v212
  %v222 = vsel %vm76, %v212, %v215
  %v223 = vsel %vm78, %v215, %v218
  %v227 = vrot.slane %v221, 1
  %v228 = vrot.slane %v222, 1
  %v229 = vrot.slane %v223, 1
  %v230 = vrot.slane %v220, 1
  %v235 = vsel %vm108, %v208, %v227
  %v236 = vsel %vm108, %v209, %v228
  %v237 = vsel %vm108, %v210, %v229
  %v238 = vsel %vm108, %v206, %v230
  %vm243 = vcmask 1045504
  %v244 = vrot.slane %v151, 2
  %v245 = vrot.slane %v152, 2
  %v246 = vrot.slane %v153, 2
  %v247 = vrot.slane %v154, 2
  %v248 = vrot.slane %v143, 2
  %v249 = vsel %vm243, %v244, %v248
  %v250 = vrot.slane %v144, 2
  %v251 = vsel %vm243, %v245, %v250
  %v252 = vrot.slane %v145, 2
  %v253 = vsel %vm243, %v246, %v252
  %v254 = vrot.slane %v146, 2
  %v255 = vsel %vm243, %v247, %v254
  %vm272 = vcmask 1043456
  %v273 = vrot.slane %v193, 4
  %v274 = vrot.slane %v194, 4
  %v275 = vrot.slane %v195, 4
  %v276 = vrot.slane %v196, 4
  %v277 = vrot.slane %v185, 4
  %v278 = vsel %vm272, %v273, %v277
  %v279 = vrot.slane %v186, 4
  %v280 = vsel %vm272, %v274, %v279
  %v281 = vrot.slane %v187, 4
  %v282 = vsel %vm272, %v275, %v281
  %v283 = vrot.slane %v188, 4
  %v284 = vsel %vm272, %v276, %v283
  %vm301 = vcmask 1041408
  %v302 = vrot.slane %v235, 6
  %v303 = vrot.slane %v236, 6
  %v304 = vrot.slane %v237, 6
  %v305 = vrot.slane %v238, 6
  %v306 = vrot.slane %v227, 6
  %v307 = vsel %vm301, %v302, %v306
  %v308 = vrot.slane %v228, 6
  %v309 = vsel %vm301, %v303, %v308
  %v310 = vrot.slane %v229, 6
  %v311 = vsel %vm301, %v304, %v310
  %v312 = vrot.slane %v230, 6
  %v313 = vsel %vm301, %v305, %v312
  %v322 = vsel %vm243, %v100, %v244
  %v323 = vsel %vm243, %v101, %v245
  %v324 = vsel %vm243, %v102, %v246
  %v325 = vsel %vm243, %v103, %v247
  %v326 = vsel %vm272, %v248, %v273
  %v327 = vsel %vm272, %v250, %v274
  %v328 = vsel %vm272, %v252, %v275
  %v329 = vsel %vm272, %v254, %v276
  %v330 = vsel %vm301, %v277, %v302
  %v331 = vsel %vm301, %v279, %v303
  %v332 = vsel %vm301, %v281, %v304
  %v333 = vsel %vm301, %v283, %v305
  %v334 = vpack.c.bf16 %v322, %v109
  %v335 = vpack.c.bf16 %v323, %v110
  %v336 = vpack.c.bf16 %v324, %v111
  %v337 = vpack.c.bf16 %v325, %v112
  %v338 = vpack.c.bf16 %v326, %v249
  %v339 = vpack.c.bf16 %v327, %v251
  %v340 = vpack.c.bf16 %v328, %v253
  %v341 = vpack.c.bf16 %v329, %v255
  %v342 = vpack.c.bf16 %v330, %v278
  %v343 = vpack.c.bf16 %v331, %v280
  %v344 = vpack.c.bf16 %v332, %v282
  %v345 = vpack.c.bf16 %v333, %v284
  %v346 = vpack.c.bf16 %v307, %v307
  %v347 = vpack.c.bf16 %v309, %v309
  %v348 = vpack.c.bf16 %v311, %v311
  %v349 = vpack.c.bf16 %v313, %v313
  %v350 = vld [vmem:[%s3] sm:$0x1]
  %v351 = vld [vmem:[%s1] sm:$0xf]
  %v352 = vld [vmem:[%s1 + $0x4] sm:$0xf]
  %v353 = vld [vmem:[%s1 + $0x8] sm:$0xf]
  %v354 = vld [vmem:[%s1 + $0xc] sm:$0xf]
  %v355 = vld [vmem:[%s1 + $0x10] sm:$0xf]
  %v356 = vld [vmem:[%s1 + $0x14] sm:$0xf]
  %v357 = vld [vmem:[%s1 + $0x18] sm:$0xf]
  %v358 = vld [vmem:[%s1 + $0x1c] sm:$0xf]
  %v359 = vld [vmem:[%s1 + $0x20] sm:$0xf]
  %v360 = vld [vmem:[%s1 + $0x24] sm:$0xf]
  %v361 = vld [vmem:[%s1 + $0x28] sm:$0xf]
  %v362 = vld [vmem:[%s1 + $0x2c] sm:$0xf]
  %v363 = vld [vmem:[%s1 + $0x30] sm:$0xf]
  %v364 = vld [vmem:[%s1 + $0x34] sm:$0xf]
  %v365 = vld [vmem:[%s1 + $0x38] sm:$0xf]
  %v366 = vld [vmem:[%s1 + $0x3c] sm:$0xf]
  %v367 = vld [vmem:[%s1 + $0x40] sm:$0xf]
  %v368 = vld [vmem:[%s1 + $0x44] sm:$0xf]
  %v369 = vld [vmem:[%s1 + $0x48] sm:$0xf]
  %v370 = vld [vmem:[%s1 + $0x4c] sm:$0xf]
  %v371 = vld [vmem:[%s1 + $0x50] sm:$0xf]
  %v372 = vld [vmem:[%s1 + $0x54] sm:$0xf]
  %v373 = vld [vmem:[%s1 + $0x58] sm:$0xf]
  %v374 = vld [vmem:[%s1 + $0x5c] sm:$0xf]
  %v375 = vld [vmem:[%s1 + $0x60] sm:$0xf]
  %v376 = vld [vmem:[%s1 + $0x64] sm:$0xf]
  %v377 = vld [vmem:[%s1 + $0x68] sm:$0xf]
  %v378 = vld [vmem:[%s1 + $0x6c] sm:$0xf]
  %v379 = vld [vmem:[%s1 + $0x70] sm:$0xf]
  %v380 = vld [vmem:[%s1 + $0x74] sm:$0xf]
  %v381 = vld [vmem:[%s1 + $0x78] sm:$0xf]
  %v382 = vld [vmem:[%s1 + $0x7c] sm:$0xf]
  %v383 = vld [vmem:[%s1 + $0x80] sm:$0xf]
  %v384 = vld [vmem:[%s1 + $0x84] sm:$0xf]
  %v385 = vld [vmem:[%s1 + $0x88] sm:$0xf]
  %v386 = vld [vmem:[%s1 + $0x8c] sm:$0xf]
  %v387 = vld [vmem:[%s1 + $0x90] sm:$0xf]
  %v388 = vld [vmem:[%s1 + $0x94] sm:$0xf]
  %v389 = vld [vmem:[%s1 + $0x98] sm:$0xf]
  %v390 = vld [vmem:[%s1 + $0x9c] sm:$0xf]
  %v391 = vld [vmem:[%s1 + $0xa0] sm:$0xf]
  %v392 = vld [vmem:[%s1 + $0xa4] sm:$0xf]
  %v393 = vld [vmem:[%s1 + $0xa8] sm:$0xf]
  %v394 = vld [vmem:[%s1 + $0xac] sm:$0xf]
  %v395 = vld [vmem:[%s1 + $0xb0] sm:$0xf]
  %v396 = vld [vmem:[%s1 + $0xb4] sm:$0xf]
  %v397 = vld [vmem:[%s1 + $0xb8] sm:$0xf]
  %v398 = vld [vmem:[%s1 + $0xbc] sm:$0xf]
  %v399 = vld [vmem:[%s1 + $0xc0] sm:$0xf]
  %v400 = vld [vmem:[%s1 + $0xc4] sm:$0xf]
  %v401 = vld [vmem:[%s1 + $0xc8] sm:$0xf]
  %v402 = vld [vmem:[%s1 + $0xcc] sm:$0xf]
  %v403 = vld [vmem:[%s1 + $0xd0] sm:$0xf]
  %v404 = vld [vmem:[%s1 + $0xd4] sm:$0xf]
  %v405 = vld [vmem:[%s1 + $0xd8] sm:$0xf]
  %v406 = vld [vmem:[%s1 + $0xdc] sm:$0xf]
  %v407 = vld [vmem:[%s1 + $0xe0] sm:$0xf]
  %v408 = vld [vmem:[%s1 + $0xe4] sm:$0xf]
  %v409 = vld [vmem:[%s1 + $0xe8] sm:$0xf]
  %v410 = vld [vmem:[%s1 + $0xec] sm:$0xf]
  %v412 = vlaneseq
  %v413 = vshrl.u32 %v412, 7
  %v414 = vsub.s32 0, %v413
  %v415 = vrot.slane %v350, %v414
  %v477 = vunpack.c.l.b16 %v351
  %v478 = vunpack.c.l.b16 %v352
  %v479 = vunpack.c.l.b16 %v353
  %v480 = vunpack.c.l.b16 %v354
  %v481 = vunpack.c.l.b16 %v355
  %v482 = vunpack.c.l.b16 %v356
  %v483 = vunpack.c.l.b16 %v357
  %v484 = vunpack.c.l.b16 %v358
  %v485 = vunpack.c.l.b16 %v359
  %v486 = vunpack.c.l.b16 %v360
  %v487 = vunpack.c.l.b16 %v361
  %v488 = vunpack.c.l.b16 %v362
  %v489 = vunpack.c.l.b16 %v363
  %v490 = vunpack.c.l.b16 %v364
  %v491 = vunpack.c.l.b16 %v365
  %v492 = vunpack.c.l.b16 %v366
  %v493 = vunpack.c.l.b16 %v367
  %v494 = vunpack.c.l.b16 %v368
  %v495 = vunpack.c.l.b16 %v369
  %v496 = vunpack.c.l.b16 %v370
  %v497 = vunpack.c.l.b16 %v371
  %v498 = vunpack.c.l.b16 %v372
  %v499 = vunpack.c.l.b16 %v373
  %v500 = vunpack.c.l.b16 %v374
  %v501 = vunpack.c.l.b16 %v375
  %v502 = vunpack.c.l.b16 %v376
  %v503 = vunpack.c.l.b16 %v377
  %v504 = vunpack.c.l.b16 %v378
  %v505 = vunpack.c.l.b16 %v379
  %v506 = vunpack.c.l.b16 %v380
  %v507 = vunpack.c.l.b16 %v381
  %v508 = vunpack.c.l.b16 %v382
  %v509 = vunpack.c.l.b16 %v383
  %v510 = vunpack.c.l.b16 %v384
  %v511 = vunpack.c.l.b16 %v385
  %v512 = vunpack.c.l.b16 %v386
  %v513 = vunpack.c.l.b16 %v387
  %v514 = vunpack.c.l.b16 %v388
  %v515 = vunpack.c.l.b16 %v389
  %v516 = vunpack.c.l.b16 %v390
  %v517 = vunpack.c.l.b16 %v391
  %v518 = vunpack.c.l.b16 %v392
  %v519 = vunpack.c.l.b16 %v393
  %v520 = vunpack.c.l.b16 %v394
  %v521 = vunpack.c.l.b16 %v395
  %v522 = vunpack.c.l.b16 %v396
  %v523 = vunpack.c.l.b16 %v397
  %v524 = vunpack.c.l.b16 %v398
  %v525 = vunpack.c.l.b16 %v399
  %v526 = vunpack.c.l.b16 %v400
  %v527 = vunpack.c.l.b16 %v401
  %v528 = vunpack.c.l.b16 %v402
  %v529 = vunpack.c.l.b16 %v403
  %v530 = vunpack.c.l.b16 %v404
  %v531 = vunpack.c.l.b16 %v405
  %v532 = vunpack.c.l.b16 %v406
  %v533 = vunpack.c.l.b16 %v407
  %v534 = vunpack.c.l.b16 %v408
  %v535 = vunpack.c.l.b16 %v409
  %v536 = vunpack.c.l.b16 %v410
  %v537 = vpack.c.b16 %v478, %v477
  %v538 = vpack.c.b16 %v480, %v479
  %v539 = vpack.c.b16 %v482, %v481
  %v540 = vpack.c.b16 %v484, %v483
  %v541 = vpack.c.b16 %v486, %v485
  %v542 = vpack.c.b16 %v488, %v487
  %v543 = vpack.c.b16 %v490, %v489
  %v544 = vpack.c.b16 %v492, %v491
  %v545 = vpack.c.b16 %v494, %v493
  %v546 = vpack.c.b16 %v496, %v495
  %v547 = vpack.c.b16 %v498, %v497
  %v548 = vpack.c.b16 %v500, %v499
  %v549 = vpack.c.b16 %v502, %v501
  %v550 = vpack.c.b16 %v504, %v503
  %v551 = vpack.c.b16 %v506, %v505
  %v552 = vpack.c.b16 %v508, %v507
  %v553 = vpack.c.b16 %v510, %v509
  %v554 = vpack.c.b16 %v512, %v511
  %v555 = vpack.c.b16 %v514, %v513
  %v556 = vpack.c.b16 %v516, %v515
  %v557 = vpack.c.b16 %v518, %v517
  %v558 = vpack.c.b16 %v520, %v519
  %v559 = vpack.c.b16 %v522, %v521
  %v560 = vpack.c.b16 %v524, %v523
  %v561 = vpack.c.b16 %v526, %v525
  %v562 = vpack.c.b16 %v528, %v527
  %v563 = vpack.c.b16 %v530, %v529
  %v564 = vpack.c.b16 %v532, %v531
  %v565 = vpack.c.b16 %v534, %v533
  %v566 = vpack.c.b16 %v536, %v535
  %v598 = vsel %vm74, %v337, 0
  %v601 = vsel %vm74, %v341, 0
  %v604 = vsel %vm74, %v345, 0
  %v607 = vsel %vm74, %v349, 0
  %609 = vmatprep.subr.bf16.mxu0 0
  %610 = vmatpush1.bf16.msra.mxu0 %v544
  %611 = vmatprep.subr.bf16.mxu0 0
  %612 = vmatpush1.bf16.msra.mxu0 %v543
  %613 = vmatprep.subr.bf16.mxu0 0
  %614 = vmatpush1.bf16.msra.mxu0 %v542
  %615 = vmatprep.subr.bf16.mxu0 0
  %616 = vmatpush1.bf16.msra.mxu0 %v541
  %617 = vmatprep.subr.bf16.mxu0 0
  %618 = vmatpush1.bf16.msra.mxu0 %v540
  %619 = vmatprep.subr.bf16.mxu0 0
  %620 = vmatpush1.bf16.msra.mxu0 %v539
  %621 = vmatprep.subr.bf16.mxu0 0
  %622 = vmatpush1.bf16.msra.mxu0 %v538
  %623 = vmatprep.subr.bf16.mxu0 0
  %624 = vmatpush1.bf16.msra.mxu0 %v537
  %625 = vmatprep.subr.bf16.mxu0 0
  %626 = vmatpush2.bf16.msra.mxu0 %v552
  %627 = vmatprep.subr.bf16.mxu0 0
  %628 = vmatpush2.bf16.msra.mxu0 %v551
  %629 = vmatprep.subr.bf16.mxu0 0
  %630 = vmatpush2.bf16.msra.mxu0 %v550
  %631 = vmatprep.subr.bf16.mxu0 0
  %632 = vmatpush2.bf16.msra.mxu0 %v549
  %633 = vmatprep.subr.bf16.mxu0 0
  %634 = vmatpush2.bf16.msra.mxu0 %v548
  %635 = vmatprep.subr.bf16.mxu0 0
  %636 = vmatpush2.bf16.msra.mxu0 %v547
  %637 = vmatprep.subr.bf16.mxu0 0
  %638 = vmatpush2.bf16.msra.mxu0 %v546
  %639 = vmatprep.subr.bf16.mxu0 0
  %640 = vmatpush2.bf16.msra.mxu0 %v545
  %641 = vmatprep.mubr.bf16.mxu0 %v335
  %642 = vmatmul.mubr.bf16.gmra.mxu0 %v334
  %v643 = vpop.f32.mrf.mxu0
  %v644 = vadd.f32 %v415, %v643
  %v645 = vpop.f32.mrf.mxu0
  %v646 = vpop.f32.mrf.mxu0
  %v647 = vadd.f32 %v415, %v646
  %v648 = vpop.f32.mrf.mxu0
  %649 = vmatprep.mubr.bf16.mxu0 %v339
  %650 = vmatmul.mubr.bf16.gmra.mxu0 %v338
  %v651 = vpop.f32.mrf.mxu0
  %v652 = vadd.f32 %v415, %v651
  %v653 = vpop.f32.mrf.mxu0
  %v654 = vpop.f32.mrf.mxu0
  %v655 = vadd.f32 %v415, %v654
  %v656 = vpop.f32.mrf.mxu0
  %657 = vmatprep.mubr.bf16.mxu0 %v343
  %658 = vmatmul.mubr.bf16.gmra.mxu0 %v342
  %v659 = vpop.f32.mrf.mxu0
  %v660 = vadd.f32 %v415, %v659
  %v661 = vpop.f32.mrf.mxu0
  %v662 = vpop.f32.mrf.mxu0
  %v663 = vadd.f32 %v415, %v662
  %v664 = vpop.f32.mrf.mxu0
  %665 = vmatprep.mubr.bf16.mxu0 %v347
  %666 = vmatmul.mubr.bf16.gmra.mxu0 %v346
  %v667 = vpop.f32.mrf.mxu0
  %v668 = vadd.f32 %v415, %v667
  %v669 = vpop.f32.mrf.mxu0
  %v670 = vpop.f32.mrf.mxu0
  %v671 = vpop.f32.mrf.mxu0
  %672 = vdwg.mxu0
  %673 = vmatprep.subr.bf16.mxu0 0
  %674 = vmatpush1.bf16.msra.mxu0 %v560
  %675 = vmatprep.subr.bf16.mxu0 0
  %676 = vmatpush1.bf16.msra.mxu0 %v559
  %677 = vmatprep.subr.bf16.mxu0 0
  %678 = vmatpush1.bf16.msra.mxu0 %v558
  %679 = vmatprep.subr.bf16.mxu0 0
  %680 = vmatpush1.bf16.msra.mxu0 %v557
  %681 = vmatprep.subr.bf16.mxu0 0
  %682 = vmatpush1.bf16.msra.mxu0 %v556
  %683 = vmatprep.subr.bf16.mxu0 0
  %684 = vmatpush1.bf16.msra.mxu0 %v555
  %685 = vmatprep.subr.bf16.mxu0 0
  %686 = vmatpush1.bf16.msra.mxu0 %v554
  %687 = vmatprep.subr.bf16.mxu0 0
  %688 = vmatpush1.bf16.msra.mxu0 %v553
  %689 = vmatprep.subr.bf16.mxu0 0
  %690 = vmatpush2.bf16.msra.mxu0 0
  %691 = vmatprep.subr.bf16.mxu0 0
  %692 = vmatpush2.bf16.msra.mxu0 0
  %693 = vmatprep.subr.bf16.mxu0 0
  %694 = vmatpush2.bf16.msra.mxu0 %v566
  %695 = vmatprep.subr.bf16.mxu0 0
  %696 = vmatpush2.bf16.msra.mxu0 %v565
  %697 = vmatprep.subr.bf16.mxu0 0
  %698 = vmatpush2.bf16.msra.mxu0 %v564
  %699 = vmatprep.subr.bf16.mxu0 0
  %700 = vmatpush2.bf16.msra.mxu0 %v563
  %701 = vmatprep.subr.bf16.mxu0 0
  %702 = vmatpush2.bf16.msra.mxu0 %v562
  %703 = vmatprep.subr.bf16.mxu0 0
  %704 = vmatpush2.bf16.msra.mxu0 %v561
  %705 = vmatprep.mubr.bf16.mxu0 %v598
  %706 = vmatmul.mubr.bf16.gmra.mxu0 %v336
  %v707 = vpop.f32.mrf.mxu0
  %v708 = vadd.f32 %v644, %v707
  %v709 = vpop.f32.mrf.mxu0
  %v710 = vpop.f32.mrf.mxu0
  %v711 = vadd.f32 %v647, %v710
  %v712 = vpop.f32.mrf.mxu0
  %713 = vmatprep.mubr.bf16.mxu0 %v601
  %714 = vmatmul.mubr.bf16.gmra.mxu0 %v340
  %v715 = vpop.f32.mrf.mxu0
  %v716 = vadd.f32 %v652, %v715
  %v717 = vpop.f32.mrf.mxu0
  %v718 = vpop.f32.mrf.mxu0
  %v719 = vadd.f32 %v655, %v718
  %v720 = vpop.f32.mrf.mxu0
  %721 = vmatprep.mubr.bf16.mxu0 %v604
  %722 = vmatmul.mubr.bf16.gmra.mxu0 %v344
  %v723 = vpop.f32.mrf.mxu0
  %v724 = vadd.f32 %v660, %v723
  %v725 = vpop.f32.mrf.mxu0
  %v726 = vpop.f32.mrf.mxu0
  %v727 = vadd.f32 %v663, %v726
  %v728 = vpop.f32.mrf.mxu0
  %729 = vmatprep.mubr.bf16.mxu0 %v607
  %730 = vmatmul.mubr.bf16.gmra.mxu0 %v348
  %v731 = vpop.f32.mrf.mxu0
  %v732 = vadd.f32 %v668, %v731
  %v733 = vpop.f32.mrf.mxu0
  %v734 = vpop.f32.mrf.mxu0
  %v735 = vpop.f32.mrf.mxu0
  %736 = vdwg.mxu0
  %v737 = vld [vmem:[%s2] sm:$0xf]
  %v738 = vld [vmem:[%s2 + $0x4] sm:$0xf]
  %v739 = vld [vmem:[%s2 + $0x8] sm:$0xf]
  %v740 = vld [vmem:[%s2 + $0xc] sm:$0xf]
  %v741 = vld [vmem:[%s2 + $0x10] sm:$0xf]
  %v742 = vld [vmem:[%s2 + $0x14] sm:$0xf]
  %v743 = vld [vmem:[%s2 + $0x18] sm:$0xf]
  %v744 = vld [vmem:[%s2 + $0x1c] sm:$0xf]
  %v745 = vld [vmem:[%s2 + $0x20] sm:$0xf]
  %v746 = vld [vmem:[%s2 + $0x24] sm:$0xf]
  %v747 = vld [vmem:[%s2 + $0x28] sm:$0xf]
  %v748 = vld [vmem:[%s2 + $0x2c] sm:$0xf]
  %v749 = vld [vmem:[%s2 + $0x30] sm:$0xf]
  %v750 = vld [vmem:[%s2 + $0x34] sm:$0xf]
  %v751 = vld [vmem:[%s2 + $0x38] sm:$0xf]
  %v752 = vld [vmem:[%s2 + $0x3c] sm:$0xf]
  %v753 = vld [vmem:[%s2 + $0x40] sm:$0xf]
  %v754 = vld [vmem:[%s2 + $0x44] sm:$0xf]
  %v755 = vld [vmem:[%s2 + $0x48] sm:$0xf]
  %v756 = vld [vmem:[%s2 + $0x4c] sm:$0xf]
  %v757 = vld [vmem:[%s2 + $0x50] sm:$0xf]
  %v758 = vld [vmem:[%s2 + $0x54] sm:$0xf]
  %v759 = vld [vmem:[%s2 + $0x58] sm:$0xf]
  %v760 = vld [vmem:[%s2 + $0x5c] sm:$0xf]
  %v761 = vld [vmem:[%s2 + $0x60] sm:$0xf]
  %v762 = vld [vmem:[%s2 + $0x64] sm:$0xf]
  %v763 = vld [vmem:[%s2 + $0x68] sm:$0xf]
  %v764 = vld [vmem:[%s2 + $0x6c] sm:$0xf]
  %v765 = vld [vmem:[%s2 + $0x70] sm:$0xf]
  %v766 = vld [vmem:[%s2 + $0x74] sm:$0xf]
  %v767 = vld [vmem:[%s2 + $0x78] sm:$0xf]
  %v768 = vld [vmem:[%s2 + $0x7c] sm:$0xf]
  %v769 = vld [vmem:[%s2 + $0x80] sm:$0xf]
  %v770 = vld [vmem:[%s2 + $0x84] sm:$0xf]
  %v771 = vld [vmem:[%s2 + $0x88] sm:$0xf]
  %v772 = vld [vmem:[%s2 + $0x8c] sm:$0xf]
  %v773 = vld [vmem:[%s2 + $0x90] sm:$0xf]
  %v774 = vld [vmem:[%s2 + $0x94] sm:$0xf]
  %v775 = vld [vmem:[%s2 + $0x98] sm:$0xf]
  %v776 = vld [vmem:[%s2 + $0x9c] sm:$0xf]
  %v777 = vld [vmem:[%s2 + $0xa0] sm:$0xf]
  %v778 = vld [vmem:[%s2 + $0xa4] sm:$0xf]
  %v779 = vld [vmem:[%s2 + $0xa8] sm:$0xf]
  %v780 = vld [vmem:[%s2 + $0xac] sm:$0xf]
  %v781 = vld [vmem:[%s2 + $0xb0] sm:$0xf]
  %v782 = vld [vmem:[%s2 + $0xb4] sm:$0xf]
  %v783 = vld [vmem:[%s2 + $0xb8] sm:$0xf]
  %v784 = vld [vmem:[%s2 + $0xbc] sm:$0xf]
  %v785 = vld [vmem:[%s2 + $0xc0] sm:$0xf]
  %v786 = vld [vmem:[%s2 + $0xc4] sm:$0xf]
  %v787 = vld [vmem:[%s2 + $0xc8] sm:$0xf]
  %v788 = vld [vmem:[%s2 + $0xcc] sm:$0xf]
  %v789 = vld [vmem:[%s2 + $0xd0] sm:$0xf]
  %v790 = vld [vmem:[%s2 + $0xd4] sm:$0xf]
  %v791 = vld [vmem:[%s2 + $0xd8] sm:$0xf]
  %v792 = vld [vmem:[%s2 + $0xdc] sm:$0xf]
  %v793 = vld [vmem:[%s2 + $0xe0] sm:$0xf]
  %v794 = vld [vmem:[%s2 + $0xe4] sm:$0xf]
  %v795 = vld [vmem:[%s2 + $0xe8] sm:$0xf]
  %v796 = vld [vmem:[%s2 + $0xec] sm:$0xf]
  %v857 = vunpack.c.l.b16 %v737
  %v858 = vunpack.c.l.b16 %v738
  %v859 = vunpack.c.l.b16 %v739
  %v860 = vunpack.c.l.b16 %v740
  %v861 = vunpack.c.l.b16 %v741
  %v862 = vunpack.c.l.b16 %v742
  %v863 = vunpack.c.l.b16 %v743
  %v864 = vunpack.c.l.b16 %v744
  %v865 = vunpack.c.l.b16 %v745
  %v866 = vunpack.c.l.b16 %v746
  %v867 = vunpack.c.l.b16 %v747
  %v868 = vunpack.c.l.b16 %v748
  %v869 = vunpack.c.l.b16 %v749
  %v870 = vunpack.c.l.b16 %v750
  %v871 = vunpack.c.l.b16 %v751
  %v872 = vunpack.c.l.b16 %v752
  %v873 = vunpack.c.l.b16 %v753
  %v874 = vunpack.c.l.b16 %v754
  %v875 = vunpack.c.l.b16 %v755
  %v876 = vunpack.c.l.b16 %v756
  %v877 = vunpack.c.l.b16 %v757
  %v878 = vunpack.c.l.b16 %v758
  %v879 = vunpack.c.l.b16 %v759
  %v880 = vunpack.c.l.b16 %v760
  %v881 = vunpack.c.l.b16 %v761
  %v882 = vunpack.c.l.b16 %v762
  %v883 = vunpack.c.l.b16 %v763
  %v884 = vunpack.c.l.b16 %v764
  %v885 = vunpack.c.l.b16 %v765
  %v886 = vunpack.c.l.b16 %v766
  %v887 = vunpack.c.l.b16 %v767
  %v888 = vunpack.c.l.b16 %v768
  %v889 = vunpack.c.l.b16 %v769
  %v890 = vunpack.c.l.b16 %v770
  %v891 = vunpack.c.l.b16 %v771
  %v892 = vunpack.c.l.b16 %v772
  %v893 = vunpack.c.l.b16 %v773
  %v894 = vunpack.c.l.b16 %v774
  %v895 = vunpack.c.l.b16 %v775
  %v896 = vunpack.c.l.b16 %v776
  %v897 = vunpack.c.l.b16 %v777
  %v898 = vunpack.c.l.b16 %v778
  %v899 = vunpack.c.l.b16 %v779
  %v900 = vunpack.c.l.b16 %v780
  %v901 = vunpack.c.l.b16 %v781
  %v902 = vunpack.c.l.b16 %v782
  %v903 = vunpack.c.l.b16 %v783
  %v904 = vunpack.c.l.b16 %v784
  %v905 = vunpack.c.l.b16 %v785
  %v906 = vunpack.c.l.b16 %v786
  %v907 = vunpack.c.l.b16 %v787
  %v908 = vunpack.c.l.b16 %v788
  %v909 = vunpack.c.l.b16 %v789
  %v910 = vunpack.c.l.b16 %v790
  %v911 = vunpack.c.l.b16 %v791
  %v912 = vunpack.c.l.b16 %v792
  %v913 = vunpack.c.l.b16 %v793
  %v914 = vunpack.c.l.b16 %v794
  %v915 = vunpack.c.l.b16 %v795
  %v916 = vunpack.c.l.b16 %v796
  %v917 = vpack.c.b16 %v858, %v857
  %v918 = vpack.c.b16 %v860, %v859
  %v919 = vpack.c.b16 %v862, %v861
  %v920 = vpack.c.b16 %v864, %v863
  %v921 = vpack.c.b16 %v866, %v865
  %v922 = vpack.c.b16 %v868, %v867
  %v923 = vpack.c.b16 %v870, %v869
  %v924 = vpack.c.b16 %v872, %v871
  %v925 = vpack.c.b16 %v874, %v873
  %v926 = vpack.c.b16 %v876, %v875
  %v927 = vpack.c.b16 %v878, %v877
  %v928 = vpack.c.b16 %v880, %v879
  %v929 = vpack.c.b16 %v882, %v881
  %v930 = vpack.c.b16 %v884, %v883
  %v931 = vpack.c.b16 %v886, %v885
  %v932 = vpack.c.b16 %v888, %v887
  %v933 = vpack.c.b16 %v890, %v889
  %v934 = vpack.c.b16 %v892, %v891
  %v935 = vpack.c.b16 %v894, %v893
  %v936 = vpack.c.b16 %v896, %v895
  %v937 = vpack.c.b16 %v898, %v897
  %v938 = vpack.c.b16 %v900, %v899
  %v939 = vpack.c.b16 %v902, %v901
  %v940 = vpack.c.b16 %v904, %v903
  %v941 = vpack.c.b16 %v906, %v905
  %v942 = vpack.c.b16 %v908, %v907
  %v943 = vpack.c.b16 %v910, %v909
  %v944 = vpack.c.b16 %v912, %v911
  %v945 = vpack.c.b16 %v914, %v913
  %v946 = vpack.c.b16 %v916, %v915
  %977 = vmatprep.subr.bf16.mxu0 0
  %978 = vmatpush1.bf16.msra.mxu0 %v924
  %979 = vmatprep.subr.bf16.mxu0 0
  %980 = vmatpush1.bf16.msra.mxu0 %v923
  %981 = vmatprep.subr.bf16.mxu0 0
  %982 = vmatpush1.bf16.msra.mxu0 %v922
  %983 = vmatprep.subr.bf16.mxu0 0
  %984 = vmatpush1.bf16.msra.mxu0 %v921
  %985 = vmatprep.subr.bf16.mxu0 0
  %986 = vmatpush1.bf16.msra.mxu0 %v920
  %987 = vmatprep.subr.bf16.mxu0 0
  %988 = vmatpush1.bf16.msra.mxu0 %v919
  %989 = vmatprep.subr.bf16.mxu0 0
  %990 = vmatpush1.bf16.msra.mxu0 %v918
  %991 = vmatprep.subr.bf16.mxu0 0
  %992 = vmatpush1.bf16.msra.mxu0 %v917
  %993 = vmatprep.subr.bf16.mxu0 0
  %994 = vmatpush2.bf16.msra.mxu0 %v932
  %995 = vmatprep.subr.bf16.mxu0 0
  %996 = vmatpush2.bf16.msra.mxu0 %v931
  %997 = vmatprep.subr.bf16.mxu0 0
  %998 = vmatpush2.bf16.msra.mxu0 %v930
  %999 = vmatprep.subr.bf16.mxu0 0
  %1000 = vmatpush2.bf16.msra.mxu0 %v929
  %1001 = vmatprep.subr.bf16.mxu0 0
  %1002 = vmatpush2.bf16.msra.mxu0 %v928
  %1003 = vmatprep.subr.bf16.mxu0 0
  %1004 = vmatpush2.bf16.msra.mxu0 %v927
  %1005 = vmatprep.subr.bf16.mxu0 0
  %1006 = vmatpush2.bf16.msra.mxu0 %v926
  %1007 = vmatprep.subr.bf16.mxu0 0
  %1008 = vmatpush2.bf16.msra.mxu0 %v925
  %1009 = vmatprep.mubr.bf16.mxu0 %v335
  %1010 = vmatmul.mubr.bf16.gmra.mxu0 %v334
  %v1011 = vpop.f32.mrf.mxu0
  %v1012 = vadd.f32 %v415, %v1011
  %v1013 = vpop.f32.mrf.mxu0
  %v1014 = vpop.f32.mrf.mxu0
  %v1015 = vadd.f32 %v415, %v1014
  %v1016 = vpop.f32.mrf.mxu0
  %1017 = vmatprep.mubr.bf16.mxu0 %v339
  %1018 = vmatmul.mubr.bf16.gmra.mxu0 %v338
  %v1019 = vpop.f32.mrf.mxu0
  %v1020 = vadd.f32 %v415, %v1019
  %v1021 = vpop.f32.mrf.mxu0
  %v1022 = vpop.f32.mrf.mxu0
  %v1023 = vadd.f32 %v415, %v1022
  %v1024 = vpop.f32.mrf.mxu0
  %1025 = vmatprep.mubr.bf16.mxu0 %v343
  %1026 = vmatmul.mubr.bf16.gmra.mxu0 %v342
  %v1027 = vpop.f32.mrf.mxu0
  %v1028 = vadd.f32 %v415, %v1027
  %v1029 = vpop.f32.mrf.mxu0
  %v1030 = vpop.f32.mrf.mxu0
  %v1031 = vadd.f32 %v415, %v1030
  %v1032 = vpop.f32.mrf.mxu0
  %1033 = vmatprep.mubr.bf16.mxu0 %v347
  %1034 = vmatmul.mubr.bf16.gmra.mxu0 %v346
  %v1035 = vpop.f32.mrf.mxu0
  %v1036 = vadd.f32 %v415, %v1035
  %v1037 = vpop.f32.mrf.mxu0
  %v1038 = vpop.f32.mrf.mxu0
  %v1039 = vpop.f32.mrf.mxu0
  %1040 = vdwg.mxu0
  %1041 = vmatprep.subr.bf16.mxu0 0
  %1042 = vmatpush1.bf16.msra.mxu0 %v940
  %1043 = vmatprep.subr.bf16.mxu0 0
  %1044 = vmatpush1.bf16.msra.mxu0 %v939
  %1045 = vmatprep.subr.bf16.mxu0 0
  %1046 = vmatpush1.bf16.msra.mxu0 %v938
  %1047 = vmatprep.subr.bf16.mxu0 0
  %1048 = vmatpush1.bf16.msra.mxu0 %v937
  %1049 = vmatprep.subr.bf16.mxu0 0
  %1050 = vmatpush1.bf16.msra.mxu0 %v936
  %1051 = vmatprep.subr.bf16.mxu0 0
  %1052 = vmatpush1.bf16.msra.mxu0 %v935
  %1053 = vmatprep.subr.bf16.mxu0 0
  %1054 = vmatpush1.bf16.msra.mxu0 %v934
  %1055 = vmatprep.subr.bf16.mxu0 0
  %1056 = vmatpush1.bf16.msra.mxu0 %v933
  %1057 = vmatprep.subr.bf16.mxu0 0
  %1058 = vmatpush2.bf16.msra.mxu0 0
  %1059 = vmatprep.subr.bf16.mxu0 0
  %1060 = vmatpush2.bf16.msra.mxu0 0
  %1061 = vmatprep.subr.bf16.mxu0 0
  %1062 = vmatpush2.bf16.msra.mxu0 %v946
  %1063 = vmatprep.subr.bf16.mxu0 0
  %1064 = vmatpush2.bf16.msra.mxu0 %v945
  %1065 = vmatprep.subr.bf16.mxu0 0
  %1066 = vmatpush2.bf16.msra.mxu0 %v944
  %1067 = vmatprep.subr.bf16.mxu0 0
  %1068 = vmatpush2.bf16.msra.mxu0 %v943
  %1069 = vmatprep.subr.bf16.mxu0 0
  %1070 = vmatpush2.bf16.msra.mxu0 %v942
  %1071 = vmatprep.subr.bf16.mxu0 0
  %1072 = vmatpush2.bf16.msra.mxu0 %v941
  %1073 = vmatprep.mubr.bf16.mxu0 %v598
  %1074 = vmatmul.mubr.bf16.gmra.mxu0 %v336
  %v1075 = vpop.f32.mrf.mxu0
  %v1076 = vadd.f32 %v1012, %v1075
  %v1077 = vpop.f32.mrf.mxu0
  %v1078 = vpop.f32.mrf.mxu0
  %v1079 = vadd.f32 %v1015, %v1078
  %v1080 = vpop.f32.mrf.mxu0
  %1081 = vmatprep.mubr.bf16.mxu0 %v601
  %1082 = vmatmul.mubr.bf16.gmra.mxu0 %v340
  %v1083 = vpop.f32.mrf.mxu0
  %v1084 = vadd.f32 %v1020, %v1083
  %v1085 = vpop.f32.mrf.mxu0
  %v1086 = vpop.f32.mrf.mxu0
  %v1087 = vadd.f32 %v1023, %v1086
  %v1088 = vpop.f32.mrf.mxu0
  %1089 = vmatprep.mubr.bf16.mxu0 %v604
  %1090 = vmatmul.mubr.bf16.gmra.mxu0 %v344
  %v1091 = vpop.f32.mrf.mxu0
  %v1092 = vadd.f32 %v1028, %v1091
  %v1093 = vpop.f32.mrf.mxu0
  %v1094 = vpop.f32.mrf.mxu0
  %v1095 = vadd.f32 %v1031, %v1094
  %v1096 = vpop.f32.mrf.mxu0
  %1097 = vmatprep.mubr.bf16.mxu0 %v607
  %1098 = vmatmul.mubr.bf16.gmra.mxu0 %v348
  %v1099 = vpop.f32.mrf.mxu0
  %v1100 = vadd.f32 %v1036, %v1099
  %v1101 = vpop.f32.mrf.mxu0
  %v1102 = vpop.f32.mrf.mxu0
  %v1103 = vpop.f32.mrf.mxu0
  %1104 = vdwg.mxu0
  %v1105 = vmax.f32 %v708, %v1076
  %v1106 = vmax.f32 %v711, %v1079
  %v1107 = vmax.f32 %v716, %v1084
  %v1108 = vmax.f32 %v719, %v1087
  %v1109 = vmax.f32 %v724, %v1092
  %v1110 = vmax.f32 %v727, %v1095
  %v1111 = vmax.f32 %v732, %v1100
  %v1112 = vmax.f32 %v1105, 0.0
  %v1113 = vmax.f32 %v1106, 0.0
  %v1114 = vmax.f32 %v1107, 0.0
  %v1115 = vmax.f32 %v1108, 0.0
  %v1116 = vmax.f32 %v1109, 0.0
  %v1117 = vmax.f32 %v1110, 0.0
  %v1118 = vmax.f32 %v1111, 0.0
  %v1122 = vrot.slane %v1113, 6
  %v1123 = vrot.slane %v1114, 6
  %v1124 = vsel %vm301, %v1122, %v1123
  %v1125 = vrot.slane %v1115, 6
  %v1126 = vsel %vm301, %v1123, %v1125
  %v1129 = vmax.f32 %v1112, %v1124
  %v1130 = vmax.f32 %v1113, %v1126
  %v1133 = vrot.slane %v1117, 6
  %v1134 = vrot.slane %v1118, 6
  %v1135 = vsel %vm301, %v1133, %v1134
  %v1139 = vmax.f32 %v1115, %v1133
  %v1140 = vmax.f32 %v1116, %v1135
  %v1141 = vmax.f32 %v1117, %v1134
  %v1144 = vrot.slane %v1139, 4
  %v1145 = vrot.slane %v1140, 4
  %v1146 = vsel %vm272, %v1144, %v1145
  %1147 = vrot.lane.b32.xlu0 %v1146, 112
  %v1148 = vpop.permute.xlu0 %1147
  %v1151 = vrot.slane %v1129, 1
  %1152 = vrot.lane.b32.xlu0 %v1151, 96
  %v1153 = vpop.permute.xlu0 %1152
  %vm1155 = vcmask 1042432
  %v1156 = vrot.slane %v1139, 5
  %v1157 = vrot.slane %v1140, 5
  %v1158 = vsel %vm1155, %v1156, %v1157
  %1159 = vrot.lane.b32.xlu0 %v1158, 80
  %v1160 = vpop.permute.xlu0 %1159
  %v1162 = vrot.slane %v1129, 2
  %1163 = vrot.lane.b32.xlu0 %v1162, 64
  %v1164 = vpop.permute.xlu0 %1163
  %vm1166 = vcmask 916480
  %v1167 = vsel %vm1166, %v1129, %v1148
  %v1168 = vsel %vm74, %v1148, %v1153
  %vm1169 = vcmask 654336
  %v1170 = vsel %vm1169, %v1153, %v1160
  %v1171 = vsel %vm76, %v1160, %v1164
  %1172 = vrot.lane.b32.xlu0 %v1145, 112
  %v1173 = vpop.permute.xlu0 %1172
  %v1176 = vrot.slane %v1130, 1
  %1177 = vrot.lane.b32.xlu0 %v1176, 96
  %v1178 = vpop.permute.xlu0 %1177
  %v1181 = vrot.slane %v1141, 5
  %v1182 = vsel %vm1155, %v1157, %v1181
  %1183 = vrot.lane.b32.xlu0 %v1157, 80
  %v1184 = vpop.permute.xlu0 %1183
  %1185 = vrot.lane.b32.xlu0 %v1182, 80
  %v1186 = vpop.permute.xlu0 %1185
  %v1189 = vrot.slane %v1130, 2
  %1190 = vrot.lane.b32.xlu0 %v1189, 64
  %v1191 = vpop.permute.xlu0 %1190
  %v1193 = vsel %vm1166, %v1129, %v1173
  %v1194 = vsel %vm1166, %v1130, %v1173
  %v1195 = vsel %vm74, %v1173, %v1178
  %v1196 = vsel %vm1169, %v1178, %v1184
  %v1197 = vsel %vm1169, %v1178, %v1186
  %v1198 = vsel %vm76, %v1184, %v1191
  %v1199 = vsel %vm76, %v1186, %v1191
  %v1207 = vrot.slane %v1193, 2
  %v1208 = vrot.slane %v1194, 2
  %v1209 = vsel %vm243, %v1207, %v1208
  %v1210 = vrot.slane %v1195, 2
  %v1211 = vsel %vm243, %v1210, %v1210
  %v1212 = vrot.slane %v1196, 2
  %v1213 = vrot.slane %v1197, 2
  %v1214 = vsel %vm243, %v1212, %v1213
  %v1215 = vrot.slane %v1198, 2
  %v1216 = vrot.slane %v1199, 2
  %v1217 = vsel %vm243, %v1215, %v1216
  %v1218 = vrot.slane %v1191, 2
  %v1219 = vsel %vm243, %v1218, %v1218
  %vm1230 = vcmask 1044480
  %v1231 = vsel %vm1230, %v1167, %v1209
  %v1232 = vsel %vm1230, %v1168, %v1211
  %v1233 = vsel %vm1230, %v1170, %v1214
  %v1234 = vsel %vm1230, %v1171, %v1217
  %v1235 = vsel %vm1230, %v1164, %v1219
  %v1236 = vrot.slane %v1129, 5
  %1237 = vrot.lane.b32.xlu0 %v1236, 112
  %v1238 = vpop.permute.xlu0 %1237
  %v1240 = vrot.slane %v1139, 1
  %v1241 = vrot.slane %v1140, 1
  %v1242 = vsel %vm108, %v1240, %v1241
  %1243 = vrot.lane.b32.xlu0 %v1242, 96
  %v1244 = vpop.permute.xlu0 %1243
  %1245 = vrot.lane.b32.xlu0 %v1241, 96
  %v1246 = vpop.permute.xlu0 %1245
  %v1249 = vrot.slane %v1129, 6
  %1250 = vrot.lane.b32.xlu0 %v1249, 80
  %v1251 = vpop.permute.xlu0 %1250
  %v1253 = vrot.slane %v1139, 2
  %v1254 = vrot.slane %v1140, 2
  %v1255 = vsel %vm243, %v1253, %v1254
  %1256 = vrot.lane.b32.xlu0 %v1255, 64
  %v1257 = vpop.permute.xlu0 %1256
  %1258 = vrot.lane.b32.xlu0 %v1254, 64
  %v1259 = vpop.permute.xlu0 %1258
  %v1262 = vsel %vm1166, %v1139, %v1238
  %v1263 = vsel %vm1166, %v1140, %v1238
  %v1264 = vsel %vm74, %v1238, %v1244
  %v1265 = vsel %vm74, %v1238, %v1246
  %v1266 = vsel %vm1169, %v1244, %v1251
  %v1267 = vsel %vm1169, %v1246, %v1251
  %v1268 = vsel %vm76, %v1251, %v1257
  %v1269 = vsel %vm76, %v1251, %v1259
  %v1270 = vrot.slane %v1130, 5
  %1271 = vrot.lane.b32.xlu0 %v1270, 112
  %v1272 = vpop.permute.xlu0 %1271
  %v1274 = vrot.slane %v1141, 1
  %v1275 = vsel %vm108, %v1241, %v1274
  %1276 = vrot.lane.b32.xlu0 %v1275, 96
  %v1277 = vpop.permute.xlu0 %1276
  %v1279 = vrot.slane %v1130, 6
  %1280 = vrot.lane.b32.xlu0 %v1279, 80
  %v1281 = vpop.permute.xlu0 %1280
  %v1283 = vrot.slane %v1141, 2
  %v1284 = vsel %vm243, %v1254, %v1283
  %1285 = vrot.lane.b32.xlu0 %v1284, 64
  %v1286 = vpop.permute.xlu0 %1285
  %v1288 = vsel %vm1166, %v1140, %v1272
  %v1289 = vsel %vm74, %v1272, %v1277
  %v1290 = vsel %vm1169, %v1277, %v1281
  %v1291 = vsel %vm76, %v1281, %v1286
  %v1300 = vrot.slane %v1262, 4
  %v1301 = vrot.slane %v1263, 4
  %v1302 = vsel %vm272, %v1300, %v1301
  %v1303 = vrot.slane %v1264, 4
  %v1304 = vrot.slane %v1265, 4
  %v1305 = vsel %vm272, %v1303, %v1304
  %v1306 = vrot.slane %v1266, 4
  %v1307 = vrot.slane %v1267, 4
  %v1308 = vsel %vm272, %v1306, %v1307
  %v1309 = vrot.slane %v1268, 4
  %v1310 = vrot.slane %v1269, 4
  %v1311 = vsel %vm272, %v1309, %v1310
  %v1312 = vrot.slane %v1257, 4
  %v1313 = vrot.slane %v1259, 4
  %v1314 = vsel %vm272, %v1312, %v1313
  %v1324 = vrot.slane %v1288, 6
  %v1325 = vrot.slane %v1289, 6
  %v1326 = vrot.slane %v1290, 6
  %v1327 = vrot.slane %v1291, 6
  %v1328 = vrot.slane %v1286, 6
  %v1334 = vsel %vm1230, %v1302, %v1324
  %v1335 = vsel %vm1230, %v1305, %v1325
  %v1336 = vsel %vm1230, %v1308, %v1326
  %v1337 = vsel %vm1230, %v1311, %v1327
  %v1338 = vsel %vm1230, %v1314, %v1328
  %v1344 = vrot.slane %v1334, 6
  %v1345 = vrot.slane %v1335, 6
  %v1346 = vrot.slane %v1336, 6
  %v1347 = vrot.slane %v1337, 6
  %v1348 = vrot.slane %v1338, 6
  %v1349 = vrot.slane %v1324, 6
  %v1350 = vsel %vm301, %v1344, %v1349
  %v1351 = vrot.slane %v1325, 6
  %v1352 = vsel %vm301, %v1345, %v1351
  %v1353 = vrot.slane %v1326, 6
  %v1354 = vsel %vm301, %v1346, %v1353
  %v1355 = vrot.slane %v1327, 6
  %v1356 = vsel %vm301, %v1347, %v1355
  %v1357 = vrot.slane %v1328, 6
  %v1358 = vsel %vm301, %v1348, %v1357
  %v1369 = vsel %vm301, %v1208, %v1344
  %v1370 = vsel %vm301, %v1210, %v1345
  %v1371 = vsel %vm301, %v1213, %v1346
  %v1372 = vsel %vm301, %v1216, %v1347
  %v1373 = vsel %vm301, %v1218, %v1348
  %v1374 = vpack.c.bf16 %v1369, %v1231
  %v1375 = vpack.c.bf16 %v1370, %v1232
  %v1376 = vpack.c.bf16 %v1371, %v1233
  %v1377 = vpack.c.bf16 %v1372, %v1234
  %v1378 = vpack.c.bf16 %v1373, %v1235
  %v1379 = vpack.c.bf16 %v1350, %v1350
  %v1380 = vpack.c.bf16 %v1352, %v1352
  %v1381 = vpack.c.bf16 %v1354, %v1354
  %v1382 = vpack.c.bf16 %v1356, %v1356
  %v1383 = vpack.c.bf16 %v1358, %v1358
  %v1384 = vld [vmem:[%s6] sm:$0x1]
  %v1385 = vld [vmem:[%s4] sm:$0xf]
  %v1386 = vld [vmem:[%s4 + $0x4] sm:$0xf]
  %v1387 = vld [vmem:[%s4 + $0x8] sm:$0xf]
  %v1388 = vld [vmem:[%s4 + $0xc] sm:$0xf]
  %v1389 = vld [vmem:[%s4 + $0x10] sm:$0xf]
  %v1390 = vld [vmem:[%s4 + $0x14] sm:$0xf]
  %v1391 = vld [vmem:[%s4 + $0x18] sm:$0xf]
  %v1392 = vld [vmem:[%s4 + $0x1c] sm:$0xf]
  %v1393 = vld [vmem:[%s4 + $0x20] sm:$0xf]
  %v1394 = vld [vmem:[%s4 + $0x24] sm:$0xf]
  %v1395 = vld [vmem:[%s4 + $0x28] sm:$0xf]
  %v1396 = vld [vmem:[%s4 + $0x2c] sm:$0xf]
  %v1397 = vld [vmem:[%s4 + $0x30] sm:$0xf]
  %v1398 = vld [vmem:[%s4 + $0x34] sm:$0xf]
  %v1399 = vld [vmem:[%s4 + $0x38] sm:$0xf]
  %v1400 = vld [vmem:[%s4 + $0x3c] sm:$0xf]
  %v1401 = vld [vmem:[%s4 + $0x40] sm:$0xf]
  %v1402 = vld [vmem:[%s4 + $0x44] sm:$0xf]
  %v1403 = vld [vmem:[%s4 + $0x48] sm:$0xf]
  %v1404 = vld [vmem:[%s4 + $0x4c] sm:$0xf]
  %v1405 = vld [vmem:[%s4 + $0x50] sm:$0xf]
  %v1406 = vld [vmem:[%s4 + $0x54] sm:$0xf]
  %v1407 = vld [vmem:[%s4 + $0x58] sm:$0xf]
  %v1408 = vld [vmem:[%s4 + $0x5c] sm:$0xf]
  %v1409 = vld [vmem:[%s4 + $0x60] sm:$0xf]
  %v1410 = vld [vmem:[%s4 + $0x64] sm:$0xf]
  %v1411 = vld [vmem:[%s4 + $0x68] sm:$0xf]
  %v1412 = vld [vmem:[%s4 + $0x6c] sm:$0xf]
  %v1413 = vld [vmem:[%s4 + $0x70] sm:$0xf]
  %v1414 = vld [vmem:[%s4 + $0x74] sm:$0xf]
  %v1415 = vld [vmem:[%s4 + $0x78] sm:$0xf]
  %v1416 = vld [vmem:[%s4 + $0x7c] sm:$0xf]
  %v1417 = vld [vmem:[%s4 + $0x80] sm:$0xf]
  %v1418 = vld [vmem:[%s4 + $0x84] sm:$0xf]
  %v1419 = vld [vmem:[%s4 + $0x88] sm:$0xf]
  %v1420 = vld [vmem:[%s4 + $0x8c] sm:$0xf]
  %v1421 = vld [vmem:[%s4 + $0x90] sm:$0xf]
  %v1422 = vld [vmem:[%s4 + $0x94] sm:$0xf]
  %v1423 = vld [vmem:[%s4 + $0x98] sm:$0xf]
  %v1424 = vld [vmem:[%s4 + $0x9c] sm:$0xf]
  %v1425 = vld [vmem:[%s4 + $0xa0] sm:$0xf]
  %v1426 = vld [vmem:[%s4 + $0xa4] sm:$0xf]
  %v1427 = vld [vmem:[%s4 + $0xa8] sm:$0xf]
  %v1428 = vld [vmem:[%s4 + $0xac] sm:$0xf]
  %v1429 = vld [vmem:[%s4 + $0xb0] sm:$0xf]
  %v1430 = vld [vmem:[%s4 + $0xb4] sm:$0xf]
  %v1431 = vld [vmem:[%s4 + $0xb8] sm:$0xf]
  %v1432 = vld [vmem:[%s4 + $0xbc] sm:$0xf]
  %v1433 = vld [vmem:[%s4 + $0xc0] sm:$0xf]
  %v1434 = vld [vmem:[%s4 + $0xc4] sm:$0xf]
  %v1435 = vld [vmem:[%s4 + $0xc8] sm:$0xf]
  %v1436 = vld [vmem:[%s4 + $0xcc] sm:$0xf]
  %v1437 = vld [vmem:[%s4 + $0xd0] sm:$0xf]
  %v1438 = vld [vmem:[%s4 + $0xd4] sm:$0xf]
  %v1439 = vld [vmem:[%s4 + $0xd8] sm:$0xf]
  %v1440 = vld [vmem:[%s4 + $0xdc] sm:$0xf]
  %v1441 = vld [vmem:[%s4 + $0xe0] sm:$0xf]
  %v1442 = vld [vmem:[%s4 + $0xe4] sm:$0xf]
  %v1443 = vld [vmem:[%s4 + $0xe8] sm:$0xf]
  %v1444 = vld [vmem:[%s4 + $0xec] sm:$0xf]
  %v1445 = vld [vmem:[%s4 + $0xf0] sm:$0xf]
  %v1446 = vld [vmem:[%s4 + $0xf4] sm:$0xf]
  %v1447 = vld [vmem:[%s4 + $0xf8] sm:$0xf]
  %v1448 = vld [vmem:[%s4 + $0xfc] sm:$0xf]
  %v1449 = vld [vmem:[%s4 + $0x100] sm:$0xf]
  %v1450 = vld [vmem:[%s4 + $0x104] sm:$0xf]
  %v1451 = vld [vmem:[%s4 + $0x108] sm:$0xf]
  %v1452 = vld [vmem:[%s4 + $0x10c] sm:$0xf]
  %v1453 = vld [vmem:[%s4 + $0x110] sm:$0xf]
  %v1454 = vld [vmem:[%s4 + $0x114] sm:$0xf]
  %v1456 = vlaneseq
  %v1457 = vshrl.u32 %v1456, 7
  %v1458 = vsub.s32 0, %v1457
  %v1459 = vrot.slane %v1384, %v1458
  %v1531 = vunpack.c.l.b16 %v1385
  %v1532 = vunpack.c.l.b16 %v1386
  %v1533 = vunpack.c.l.b16 %v1387
  %v1534 = vunpack.c.l.b16 %v1388
  %v1535 = vunpack.c.l.b16 %v1389
  %v1536 = vunpack.c.l.b16 %v1390
  %v1537 = vunpack.c.l.b16 %v1391
  %v1538 = vunpack.c.l.b16 %v1392
  %v1539 = vunpack.c.l.b16 %v1393
  %v1540 = vunpack.c.l.b16 %v1394
  %v1541 = vunpack.c.l.b16 %v1395
  %v1542 = vunpack.c.l.b16 %v1396
  %v1543 = vunpack.c.l.b16 %v1397
  %v1544 = vunpack.c.l.b16 %v1398
  %v1545 = vunpack.c.l.b16 %v1399
  %v1546 = vunpack.c.l.b16 %v1400
  %v1547 = vunpack.c.l.b16 %v1401
  %v1548 = vunpack.c.l.b16 %v1402
  %v1549 = vunpack.c.l.b16 %v1403
  %v1550 = vunpack.c.l.b16 %v1404
  %v1551 = vunpack.c.l.b16 %v1405
  %v1552 = vunpack.c.l.b16 %v1406
  %v1553 = vunpack.c.l.b16 %v1407
  %v1554 = vunpack.c.l.b16 %v1408
  %v1555 = vunpack.c.l.b16 %v1409
  %v1556 = vunpack.c.l.b16 %v1410
  %v1557 = vunpack.c.l.b16 %v1411
  %v1558 = vunpack.c.l.b16 %v1412
  %v1559 = vunpack.c.l.b16 %v1413
  %v1560 = vunpack.c.l.b16 %v1414
  %v1561 = vunpack.c.l.b16 %v1415
  %v1562 = vunpack.c.l.b16 %v1416
  %v1563 = vunpack.c.l.b16 %v1417
  %v1564 = vunpack.c.l.b16 %v1418
  %v1565 = vunpack.c.l.b16 %v1419
  %v1566 = vunpack.c.l.b16 %v1420
  %v1567 = vunpack.c.l.b16 %v1421
  %v1568 = vunpack.c.l.b16 %v1422
  %v1569 = vunpack.c.l.b16 %v1423
  %v1570 = vunpack.c.l.b16 %v1424
  %v1571 = vunpack.c.l.b16 %v1425
  %v1572 = vunpack.c.l.b16 %v1426
  %v1573 = vunpack.c.l.b16 %v1427
  %v1574 = vunpack.c.l.b16 %v1428
  %v1575 = vunpack.c.l.b16 %v1429
  %v1576 = vunpack.c.l.b16 %v1430
  %v1577 = vunpack.c.l.b16 %v1431
  %v1578 = vunpack.c.l.b16 %v1432
  %v1579 = vunpack.c.l.b16 %v1433
  %v1580 = vunpack.c.l.b16 %v1434
  %v1581 = vunpack.c.l.b16 %v1435
  %v1582 = vunpack.c.l.b16 %v1436
  %v1583 = vunpack.c.l.b16 %v1437
  %v1584 = vunpack.c.l.b16 %v1438
  %v1585 = vunpack.c.l.b16 %v1439
  %v1586 = vunpack.c.l.b16 %v1440
  %v1587 = vunpack.c.l.b16 %v1441
  %v1588 = vunpack.c.l.b16 %v1442
  %v1589 = vunpack.c.l.b16 %v1443
  %v1590 = vunpack.c.l.b16 %v1444
  %v1591 = vunpack.c.l.b16 %v1445
  %v1592 = vunpack.c.l.b16 %v1446
  %v1593 = vunpack.c.l.b16 %v1447
  %v1594 = vunpack.c.l.b16 %v1448
  %v1595 = vunpack.c.l.b16 %v1449
  %v1596 = vunpack.c.l.b16 %v1450
  %v1597 = vunpack.c.l.b16 %v1451
  %v1598 = vunpack.c.l.b16 %v1452
  %v1599 = vunpack.c.l.b16 %v1453
  %v1600 = vunpack.c.l.b16 %v1454
  %v1601 = vpack.c.b16 %v1532, %v1531
  %v1602 = vpack.c.b16 %v1534, %v1533
  %v1603 = vpack.c.b16 %v1536, %v1535
  %v1604 = vpack.c.b16 %v1538, %v1537
  %v1605 = vpack.c.b16 %v1540, %v1539
  %v1606 = vpack.c.b16 %v1542, %v1541
  %v1607 = vpack.c.b16 %v1544, %v1543
  %v1608 = vpack.c.b16 %v1546, %v1545
  %v1609 = vpack.c.b16 %v1548, %v1547
  %v1610 = vpack.c.b16 %v1550, %v1549
  %v1611 = vpack.c.b16 %v1552, %v1551
  %v1612 = vpack.c.b16 %v1554, %v1553
  %v1613 = vpack.c.b16 %v1556, %v1555
  %v1614 = vpack.c.b16 %v1558, %v1557
  %v1615 = vpack.c.b16 %v1560, %v1559
  %v1616 = vpack.c.b16 %v1562, %v1561
  %v1617 = vpack.c.b16 %v1564, %v1563
  %v1618 = vpack.c.b16 %v1566, %v1565
  %v1619 = vpack.c.b16 %v1568, %v1567
  %v1620 = vpack.c.b16 %v1570, %v1569
  %v1621 = vpack.c.b16 %v1572, %v1571
  %v1622 = vpack.c.b16 %v1574, %v1573
  %v1623 = vpack.c.b16 %v1576, %v1575
  %v1624 = vpack.c.b16 %v1578, %v1577
  %v1625 = vpack.c.b16 %v1580, %v1579
  %v1626 = vpack.c.b16 %v1582, %v1581
  %v1627 = vpack.c.b16 %v1584, %v1583
  %v1628 = vpack.c.b16 %v1586, %v1585
  %v1629 = vpack.c.b16 %v1588, %v1587
  %v1630 = vpack.c.b16 %v1590, %v1589
  %v1631 = vpack.c.b16 %v1592, %v1591
  %v1632 = vpack.c.b16 %v1594, %v1593
  %v1633 = vpack.c.b16 %v1596, %v1595
  %v1634 = vpack.c.b16 %v1598, %v1597
  %v1635 = vpack.c.b16 %v1600, %v1599
  %vm1671 = vcmask 392192
  %v1673 = vsel %vm1671, %v1378, 0
  %v1676 = vsel %vm1671, %v1383, 0
  %1678 = vmatprep.subr.bf16.mxu0 0
  %1679 = vmatpush1.bf16.msra.mxu0 %v1608
  %1680 = vmatprep.subr.bf16.mxu0 0
  %1681 = vmatpush1.bf16.msra.mxu0 %v1607
  %1682 = vmatprep.subr.bf16.mxu0 0
  %1683 = vmatpush1.bf16.msra.mxu0 %v1606
  %1684 = vmatprep.subr.bf16.mxu0 0
  %1685 = vmatpush1.bf16.msra.mxu0 %v1605
  %1686 = vmatprep.subr.bf16.mxu0 0
  %1687 = vmatpush1.bf16.msra.mxu0 %v1604
  %1688 = vmatprep.subr.bf16.mxu0 0
  %1689 = vmatpush1.bf16.msra.mxu0 %v1603
  %1690 = vmatprep.subr.bf16.mxu0 0
  %1691 = vmatpush1.bf16.msra.mxu0 %v1602
  %1692 = vmatprep.subr.bf16.mxu0 0
  %1693 = vmatpush1.bf16.msra.mxu0 %v1601
  %1694 = vmatprep.subr.bf16.mxu0 0
  %1695 = vmatpush2.bf16.msra.mxu0 %v1616
  %1696 = vmatprep.subr.bf16.mxu0 0
  %1697 = vmatpush2.bf16.msra.mxu0 %v1615
  %1698 = vmatprep.subr.bf16.mxu0 0
  %1699 = vmatpush2.bf16.msra.mxu0 %v1614
  %1700 = vmatprep.subr.bf16.mxu0 0
  %1701 = vmatpush2.bf16.msra.mxu0 %v1613
  %1702 = vmatprep.subr.bf16.mxu0 0
  %1703 = vmatpush2.bf16.msra.mxu0 %v1612
  %1704 = vmatprep.subr.bf16.mxu0 0
  %1705 = vmatpush2.bf16.msra.mxu0 %v1611
  %1706 = vmatprep.subr.bf16.mxu0 0
  %1707 = vmatpush2.bf16.msra.mxu0 %v1610
  %1708 = vmatprep.subr.bf16.mxu0 0
  %1709 = vmatpush2.bf16.msra.mxu0 %v1609
  %1710 = vmatprep.mubr.bf16.mxu0 %v1375
  %1711 = vmatmul.mubr.bf16.gmra.mxu0 %v1374
  %v1712 = vpop.f32.mrf.mxu0
  %v1713 = vadd.f32 %v1459, %v1712
  %v1714 = vpop.f32.mrf.mxu0
  %v1715 = vpop.f32.mrf.mxu0
  %v1716 = vadd.f32 %v1459, %v1715
  %v1717 = vpop.f32.mrf.mxu0
  %1718 = vmatprep.mubr.bf16.mxu0 %v1380
  %1719 = vmatmul.mubr.bf16.gmra.mxu0 %v1379
  %v1720 = vpop.f32.mrf.mxu0
  %v1721 = vadd.f32 %v1459, %v1720
  %v1722 = vpop.f32.mrf.mxu0
  %v1723 = vpop.f32.mrf.mxu0
  %v1724 = vpop.f32.mrf.mxu0
  %1725 = vdwg.mxu0
  %1726 = vmatprep.subr.bf16.mxu0 0
  %1727 = vmatpush1.bf16.msra.mxu0 %v1624
  %1728 = vmatprep.subr.bf16.mxu0 0
  %1729 = vmatpush1.bf16.msra.mxu0 %v1623
  %1730 = vmatprep.subr.bf16.mxu0 0
  %1731 = vmatpush1.bf16.msra.mxu0 %v1622
  %1732 = vmatprep.subr.bf16.mxu0 0
  %1733 = vmatpush1.bf16.msra.mxu0 %v1621
  %1734 = vmatprep.subr.bf16.mxu0 0
  %1735 = vmatpush1.bf16.msra.mxu0 %v1620
  %1736 = vmatprep.subr.bf16.mxu0 0
  %1737 = vmatpush1.bf16.msra.mxu0 %v1619
  %1738 = vmatprep.subr.bf16.mxu0 0
  %1739 = vmatpush1.bf16.msra.mxu0 %v1618
  %1740 = vmatprep.subr.bf16.mxu0 0
  %1741 = vmatpush1.bf16.msra.mxu0 %v1617
  %1742 = vmatprep.subr.bf16.mxu0 0
  %1743 = vmatpush2.bf16.msra.mxu0 %v1632
  %1744 = vmatprep.subr.bf16.mxu0 0
  %1745 = vmatpush2.bf16.msra.mxu0 %v1631
  %1746 = vmatprep.subr.bf16.mxu0 0
  %1747 = vmatpush2.bf16.msra.mxu0 %v1630
  %1748 = vmatprep.subr.bf16.mxu0 0
  %1749 = vmatpush2.bf16.msra.mxu0 %v1629
  %1750 = vmatprep.subr.bf16.mxu0 0
  %1751 = vmatpush2.bf16.msra.mxu0 %v1628
  %1752 = vmatprep.subr.bf16.mxu0 0
  %1753 = vmatpush2.bf16.msra.mxu0 %v1627
  %1754 = vmatprep.subr.bf16.mxu0 0
  %1755 = vmatpush2.bf16.msra.mxu0 %v1626
  %1756 = vmatprep.subr.bf16.mxu0 0
  %1757 = vmatpush2.bf16.msra.mxu0 %v1625
  %1758 = vmatprep.mubr.bf16.mxu0 %v1377
  %1759 = vmatmul.mubr.bf16.gmra.mxu0 %v1376
  %v1760 = vpop.f32.mrf.mxu0
  %v1761 = vadd.f32 %v1713, %v1760
  %v1762 = vpop.f32.mrf.mxu0
  %v1763 = vpop.f32.mrf.mxu0
  %v1764 = vadd.f32 %v1716, %v1763
  %v1765 = vpop.f32.mrf.mxu0
  %1766 = vmatprep.mubr.bf16.mxu0 %v1382
  %1767 = vmatmul.mubr.bf16.gmra.mxu0 %v1381
  %v1768 = vpop.f32.mrf.mxu0
  %v1769 = vadd.f32 %v1721, %v1768
  %v1770 = vpop.f32.mrf.mxu0
  %v1771 = vpop.f32.mrf.mxu0
  %v1772 = vpop.f32.mrf.mxu0
  %1773 = vdwg.mxu0
  %1774 = vmatprep.subr.bf16.mxu0 0
  %1775 = vmatpush1.bf16.msra.mxu0 0
  %1776 = vmatprep.subr.bf16.mxu0 0
  %1777 = vmatpush1.bf16.msra.mxu0 0
  %1778 = vmatprep.subr.bf16.mxu0 0
  %1779 = vmatpush1.bf16.msra.mxu0 0
  %1780 = vmatprep.subr.bf16.mxu0 0
  %1781 = vmatpush1.bf16.msra.mxu0 0
  %1782 = vmatprep.subr.bf16.mxu0 0
  %1783 = vmatpush1.bf16.msra.mxu0 0
  %1784 = vmatprep.subr.bf16.mxu0 0
  %1785 = vmatpush1.bf16.msra.mxu0 %v1635
  %1786 = vmatprep.subr.bf16.mxu0 0
  %1787 = vmatpush1.bf16.msra.mxu0 %v1634
  %1788 = vmatprep.subr.bf16.mxu0 0
  %1789 = vmatpush1.bf16.msra.mxu0 %v1633
  %1790 = vmatprep.subr.bf16.mxu0 0
  %1791 = vmatpush2.bf16.msra.mxu0 0
  %1792 = vmatprep.subr.bf16.mxu0 0
  %1793 = vmatpush2.bf16.msra.mxu0 0
  %1794 = vmatprep.subr.bf16.mxu0 0
  %1795 = vmatpush2.bf16.msra.mxu0 0
  %1796 = vmatprep.subr.bf16.mxu0 0
  %1797 = vmatpush2.bf16.msra.mxu0 0
  %1798 = vmatprep.subr.bf16.mxu0 0
  %1799 = vmatpush2.bf16.msra.mxu0 0
  %1800 = vmatprep.subr.bf16.mxu0 0
  %1801 = vmatpush2.bf16.msra.mxu0 0
  %1802 = vmatprep.subr.bf16.mxu0 0
  %1803 = vmatpush2.bf16.msra.mxu0 0
  %1804 = vmatprep.subr.bf16.mxu0 0
  %1805 = vmatpush2.bf16.msra.mxu0 0
  %1806 = vmatprep.mubr.bf16.mxu0 0
  %1807 = vmatmul.mubr.bf16.gmra.mxu0 %v1673
  %v1808 = vpop.f32.mrf.mxu0
  %v1809 = vadd.f32 %v1761, %v1808
  %v1810 = vpop.f32.mrf.mxu0
  %v1811 = vpop.f32.mrf.mxu0
  %v1812 = vadd.f32 %v1764, %v1811
  %v1813 = vpop.f32.mrf.mxu0
  %1814 = vmatprep.mubr.bf16.mxu0 0
  %1815 = vmatmul.mubr.bf16.gmra.mxu0 %v1676
  %v1816 = vpop.f32.mrf.mxu0
  %v1817 = vadd.f32 %v1769, %v1816
  %v1818 = vpop.f32.mrf.mxu0
  %v1819 = vpop.f32.mrf.mxu0
  %v1820 = vpop.f32.mrf.mxu0
  %1821 = vdwg.mxu0
  %v1822 = vld [vmem:[%s5] sm:$0xf]
  %v1823 = vld [vmem:[%s5 + $0x4] sm:$0xf]
  %v1824 = vld [vmem:[%s5 + $0x8] sm:$0xf]
  %v1825 = vld [vmem:[%s5 + $0xc] sm:$0xf]
  %v1826 = vld [vmem:[%s5 + $0x10] sm:$0xf]
  %v1827 = vld [vmem:[%s5 + $0x14] sm:$0xf]
  %v1828 = vld [vmem:[%s5 + $0x18] sm:$0xf]
  %v1829 = vld [vmem:[%s5 + $0x1c] sm:$0xf]
  %v1830 = vld [vmem:[%s5 + $0x20] sm:$0xf]
  %v1831 = vld [vmem:[%s5 + $0x24] sm:$0xf]
  %v1832 = vld [vmem:[%s5 + $0x28] sm:$0xf]
  %v1833 = vld [vmem:[%s5 + $0x2c] sm:$0xf]
  %v1834 = vld [vmem:[%s5 + $0x30] sm:$0xf]
  %v1835 = vld [vmem:[%s5 + $0x34] sm:$0xf]
  %v1836 = vld [vmem:[%s5 + $0x38] sm:$0xf]
  %v1837 = vld [vmem:[%s5 + $0x3c] sm:$0xf]
  %v1838 = vld [vmem:[%s5 + $0x40] sm:$0xf]
  %v1839 = vld [vmem:[%s5 + $0x44] sm:$0xf]
  %v1840 = vld [vmem:[%s5 + $0x48] sm:$0xf]
  %v1841 = vld [vmem:[%s5 + $0x4c] sm:$0xf]
  %v1842 = vld [vmem:[%s5 + $0x50] sm:$0xf]
  %v1843 = vld [vmem:[%s5 + $0x54] sm:$0xf]
  %v1844 = vld [vmem:[%s5 + $0x58] sm:$0xf]
  %v1845 = vld [vmem:[%s5 + $0x5c] sm:$0xf]
  %v1846 = vld [vmem:[%s5 + $0x60] sm:$0xf]
  %v1847 = vld [vmem:[%s5 + $0x64] sm:$0xf]
  %v1848 = vld [vmem:[%s5 + $0x68] sm:$0xf]
  %v1849 = vld [vmem:[%s5 + $0x6c] sm:$0xf]
  %v1850 = vld [vmem:[%s5 + $0x70] sm:$0xf]
  %v1851 = vld [vmem:[%s5 + $0x74] sm:$0xf]
  %v1852 = vld [vmem:[%s5 + $0x78] sm:$0xf]
  %v1853 = vld [vmem:[%s5 + $0x7c] sm:$0xf]
  %v1854 = vld [vmem:[%s5 + $0x80] sm:$0xf]
  %v1855 = vld [vmem:[%s5 + $0x84] sm:$0xf]
  %v1856 = vld [vmem:[%s5 + $0x88] sm:$0xf]
  %v1857 = vld [vmem:[%s5 + $0x8c] sm:$0xf]
  %v1858 = vld [vmem:[%s5 + $0x90] sm:$0xf]
  %v1859 = vld [vmem:[%s5 + $0x94] sm:$0xf]
  %v1860 = vld [vmem:[%s5 + $0x98] sm:$0xf]
  %v1861 = vld [vmem:[%s5 + $0x9c] sm:$0xf]
  %v1862 = vld [vmem:[%s5 + $0xa0] sm:$0xf]
  %v1863 = vld [vmem:[%s5 + $0xa4] sm:$0xf]
  %v1864 = vld [vmem:[%s5 + $0xa8] sm:$0xf]
  %v1865 = vld [vmem:[%s5 + $0xac] sm:$0xf]
  %v1866 = vld [vmem:[%s5 + $0xb0] sm:$0xf]
  %v1867 = vld [vmem:[%s5 + $0xb4] sm:$0xf]
  %v1868 = vld [vmem:[%s5 + $0xb8] sm:$0xf]
  %v1869 = vld [vmem:[%s5 + $0xbc] sm:$0xf]
  %v1870 = vld [vmem:[%s5 + $0xc0] sm:$0xf]
  %v1871 = vld [vmem:[%s5 + $0xc4] sm:$0xf]
  %v1872 = vld [vmem:[%s5 + $0xc8] sm:$0xf]
  %v1873 = vld [vmem:[%s5 + $0xcc] sm:$0xf]
  %v1874 = vld [vmem:[%s5 + $0xd0] sm:$0xf]
  %v1875 = vld [vmem:[%s5 + $0xd4] sm:$0xf]
  %v1876 = vld [vmem:[%s5 + $0xd8] sm:$0xf]
  %v1877 = vld [vmem:[%s5 + $0xdc] sm:$0xf]
  %v1878 = vld [vmem:[%s5 + $0xe0] sm:$0xf]
  %v1879 = vld [vmem:[%s5 + $0xe4] sm:$0xf]
  %v1880 = vld [vmem:[%s5 + $0xe8] sm:$0xf]
  %v1881 = vld [vmem:[%s5 + $0xec] sm:$0xf]
  %v1882 = vld [vmem:[%s5 + $0xf0] sm:$0xf]
  %v1883 = vld [vmem:[%s5 + $0xf4] sm:$0xf]
  %v1884 = vld [vmem:[%s5 + $0xf8] sm:$0xf]
  %v1885 = vld [vmem:[%s5 + $0xfc] sm:$0xf]
  %v1886 = vld [vmem:[%s5 + $0x100] sm:$0xf]
  %v1887 = vld [vmem:[%s5 + $0x104] sm:$0xf]
  %v1888 = vld [vmem:[%s5 + $0x108] sm:$0xf]
  %v1889 = vld [vmem:[%s5 + $0x10c] sm:$0xf]
  %v1890 = vld [vmem:[%s5 + $0x110] sm:$0xf]
  %v1891 = vld [vmem:[%s5 + $0x114] sm:$0xf]
  %v1962 = vunpack.c.l.b16 %v1822
  %v1963 = vunpack.c.l.b16 %v1823
  %v1964 = vunpack.c.l.b16 %v1824
  %v1965 = vunpack.c.l.b16 %v1825
  %v1966 = vunpack.c.l.b16 %v1826
  %v1967 = vunpack.c.l.b16 %v1827
  %v1968 = vunpack.c.l.b16 %v1828
  %v1969 = vunpack.c.l.b16 %v1829
  %v1970 = vunpack.c.l.b16 %v1830
  %v1971 = vunpack.c.l.b16 %v1831
  %v1972 = vunpack.c.l.b16 %v1832
  %v1973 = vunpack.c.l.b16 %v1833
  %v1974 = vunpack.c.l.b16 %v1834
  %v1975 = vunpack.c.l.b16 %v1835
  %v1976 = vunpack.c.l.b16 %v1836
  %v1977 = vunpack.c.l.b16 %v1837
  %v1978 = vunpack.c.l.b16 %v1838
  %v1979 = vunpack.c.l.b16 %v1839
  %v1980 = vunpack.c.l.b16 %v1840
  %v1981 = vunpack.c.l.b16 %v1841
  %v1982 = vunpack.c.l.b16 %v1842
  %v1983 = vunpack.c.l.b16 %v1843
  %v1984 = vunpack.c.l.b16 %v1844
  %v1985 = vunpack.c.l.b16 %v1845
  %v1986 = vunpack.c.l.b16 %v1846
  %v1987 = vunpack.c.l.b16 %v1847
  %v1988 = vunpack.c.l.b16 %v1848
  %v1989 = vunpack.c.l.b16 %v1849
  %v1990 = vunpack.c.l.b16 %v1850
  %v1991 = vunpack.c.l.b16 %v1851
  %v1992 = vunpack.c.l.b16 %v1852
  %v1993 = vunpack.c.l.b16 %v1853
  %v1994 = vunpack.c.l.b16 %v1854
  %v1995 = vunpack.c.l.b16 %v1855
  %v1996 = vunpack.c.l.b16 %v1856
  %v1997 = vunpack.c.l.b16 %v1857
  %v1998 = vunpack.c.l.b16 %v1858
  %v1999 = vunpack.c.l.b16 %v1859
  %v2000 = vunpack.c.l.b16 %v1860
  %v2001 = vunpack.c.l.b16 %v1861
  %v2002 = vunpack.c.l.b16 %v1862
  %v2003 = vunpack.c.l.b16 %v1863
  %v2004 = vunpack.c.l.b16 %v1864
  %v2005 = vunpack.c.l.b16 %v1865
  %v2006 = vunpack.c.l.b16 %v1866
  %v2007 = vunpack.c.l.b16 %v1867
  %v2008 = vunpack.c.l.b16 %v1868
  %v2009 = vunpack.c.l.b16 %v1869
  %v2010 = vunpack.c.l.b16 %v1870
  %v2011 = vunpack.c.l.b16 %v1871
  %v2012 = vunpack.c.l.b16 %v1872
  %v2013 = vunpack.c.l.b16 %v1873
  %v2014 = vunpack.c.l.b16 %v1874
  %v2015 = vunpack.c.l.b16 %v1875
  %v2016 = vunpack.c.l.b16 %v1876
  %v2017 = vunpack.c.l.b16 %v1877
  %v2018 = vunpack.c.l.b16 %v1878
  %v2019 = vunpack.c.l.b16 %v1879
  %v2020 = vunpack.c.l.b16 %v1880
  %v2021 = vunpack.c.l.b16 %v1881
  %v2022 = vunpack.c.l.b16 %v1882
  %v2023 = vunpack.c.l.b16 %v1883
  %v2024 = vunpack.c.l.b16 %v1884
  %v2025 = vunpack.c.l.b16 %v1885
  %v2026 = vunpack.c.l.b16 %v1886
  %v2027 = vunpack.c.l.b16 %v1887
  %v2028 = vunpack.c.l.b16 %v1888
  %v2029 = vunpack.c.l.b16 %v1889
  %v2030 = vunpack.c.l.b16 %v1890
  %v2031 = vunpack.c.l.b16 %v1891
  %v2032 = vpack.c.b16 %v1963, %v1962
  %v2033 = vpack.c.b16 %v1965, %v1964
  %v2034 = vpack.c.b16 %v1967, %v1966
  %v2035 = vpack.c.b16 %v1969, %v1968
  %v2036 = vpack.c.b16 %v1971, %v1970
  %v2037 = vpack.c.b16 %v1973, %v1972
  %v2038 = vpack.c.b16 %v1975, %v1974
  %v2039 = vpack.c.b16 %v1977, %v1976
  %v2040 = vpack.c.b16 %v1979, %v1978
  %v2041 = vpack.c.b16 %v1981, %v1980
  %v2042 = vpack.c.b16 %v1983, %v1982
  %v2043 = vpack.c.b16 %v1985, %v1984
  %v2044 = vpack.c.b16 %v1987, %v1986
  %v2045 = vpack.c.b16 %v1989, %v1988
  %v2046 = vpack.c.b16 %v1991, %v1990
  %v2047 = vpack.c.b16 %v1993, %v1992
  %v2048 = vpack.c.b16 %v1995, %v1994
  %v2049 = vpack.c.b16 %v1997, %v1996
  %v2050 = vpack.c.b16 %v1999, %v1998
  %v2051 = vpack.c.b16 %v2001, %v2000
  %v2052 = vpack.c.b16 %v2003, %v2002
  %v2053 = vpack.c.b16 %v2005, %v2004
  %v2054 = vpack.c.b16 %v2007, %v2006
  %v2055 = vpack.c.b16 %v2009, %v2008
  %v2056 = vpack.c.b16 %v2011, %v2010
  %v2057 = vpack.c.b16 %v2013, %v2012
  %v2058 = vpack.c.b16 %v2015, %v2014
  %v2059 = vpack.c.b16 %v2017, %v2016
  %v2060 = vpack.c.b16 %v2019, %v2018
  %v2061 = vpack.c.b16 %v2021, %v2020
  %v2062 = vpack.c.b16 %v2023, %v2022
  %v2063 = vpack.c.b16 %v2025, %v2024
  %v2064 = vpack.c.b16 %v2027, %v2026
  %v2065 = vpack.c.b16 %v2029, %v2028
  %v2066 = vpack.c.b16 %v2031, %v2030
  %2102 = vmatprep.subr.bf16.mxu0 0
  %2103 = vmatpush1.bf16.msra.mxu0 %v2039
  %2104 = vmatprep.subr.bf16.mxu0 0
  %2105 = vmatpush1.bf16.msra.mxu0 %v2038
  %2106 = vmatprep.subr.bf16.mxu0 0
  %2107 = vmatpush1.bf16.msra.mxu0 %v2037
  %2108 = vmatprep.subr.bf16.mxu0 0
  %2109 = vmatpush1.bf16.msra.mxu0 %v2036
  %2110 = vmatprep.subr.bf16.mxu0 0
  %2111 = vmatpush1.bf16.msra.mxu0 %v2035
  %2112 = vmatprep.subr.bf16.mxu0 0
  %2113 = vmatpush1.bf16.msra.mxu0 %v2034
  %2114 = vmatprep.subr.bf16.mxu0 0
  %2115 = vmatpush1.bf16.msra.mxu0 %v2033
  %2116 = vmatprep.subr.bf16.mxu0 0
  %2117 = vmatpush1.bf16.msra.mxu0 %v2032
  %2118 = vmatprep.subr.bf16.mxu0 0
  %2119 = vmatpush2.bf16.msra.mxu0 %v2047
  %2120 = vmatprep.subr.bf16.mxu0 0
  %2121 = vmatpush2.bf16.msra.mxu0 %v2046
  %2122 = vmatprep.subr.bf16.mxu0 0
  %2123 = vmatpush2.bf16.msra.mxu0 %v2045
  %2124 = vmatprep.subr.bf16.mxu0 0
  %2125 = vmatpush2.bf16.msra.mxu0 %v2044
  %2126 = vmatprep.subr.bf16.mxu0 0
  %2127 = vmatpush2.bf16.msra.mxu0 %v2043
  %2128 = vmatprep.subr.bf16.mxu0 0
  %2129 = vmatpush2.bf16.msra.mxu0 %v2042
  %2130 = vmatprep.subr.bf16.mxu0 0
  %2131 = vmatpush2.bf16.msra.mxu0 %v2041
  %2132 = vmatprep.subr.bf16.mxu0 0
  %2133 = vmatpush2.bf16.msra.mxu0 %v2040
  %2134 = vmatprep.mubr.bf16.mxu0 %v1375
  %2135 = vmatmul.mubr.bf16.gmra.mxu0 %v1374
  %v2136 = vpop.f32.mrf.mxu0
  %v2137 = vadd.f32 %v1459, %v2136
  %v2138 = vpop.f32.mrf.mxu0
  %v2139 = vpop.f32.mrf.mxu0
  %v2140 = vadd.f32 %v1459, %v2139
  %v2141 = vpop.f32.mrf.mxu0
  %2142 = vmatprep.mubr.bf16.mxu0 %v1380
  %2143 = vmatmul.mubr.bf16.gmra.mxu0 %v1379
  %v2144 = vpop.f32.mrf.mxu0
  %v2145 = vadd.f32 %v1459, %v2144
  %v2146 = vpop.f32.mrf.mxu0
  %v2147 = vpop.f32.mrf.mxu0
  %v2148 = vpop.f32.mrf.mxu0
  %2149 = vdwg.mxu0
  %2150 = vmatprep.subr.bf16.mxu0 0
  %2151 = vmatpush1.bf16.msra.mxu0 %v2055
  %2152 = vmatprep.subr.bf16.mxu0 0
  %2153 = vmatpush1.bf16.msra.mxu0 %v2054
  %2154 = vmatprep.subr.bf16.mxu0 0
  %2155 = vmatpush1.bf16.msra.mxu0 %v2053
  %2156 = vmatprep.subr.bf16.mxu0 0
  %2157 = vmatpush1.bf16.msra.mxu0 %v2052
  %2158 = vmatprep.subr.bf16.mxu0 0
  %2159 = vmatpush1.bf16.msra.mxu0 %v2051
  %2160 = vmatprep.subr.bf16.mxu0 0
  %2161 = vmatpush1.bf16.msra.mxu0 %v2050
  %2162 = vmatprep.subr.bf16.mxu0 0
  %2163 = vmatpush1.bf16.msra.mxu0 %v2049
  %2164 = vmatprep.subr.bf16.mxu0 0
  %2165 = vmatpush1.bf16.msra.mxu0 %v2048
  %2166 = vmatprep.subr.bf16.mxu0 0
  %2167 = vmatpush2.bf16.msra.mxu0 %v2063
  %2168 = vmatprep.subr.bf16.mxu0 0
  %2169 = vmatpush2.bf16.msra.mxu0 %v2062
  %2170 = vmatprep.subr.bf16.mxu0 0
  %2171 = vmatpush2.bf16.msra.mxu0 %v2061
  %2172 = vmatprep.subr.bf16.mxu0 0
  %2173 = vmatpush2.bf16.msra.mxu0 %v2060
  %2174 = vmatprep.subr.bf16.mxu0 0
  %2175 = vmatpush2.bf16.msra.mxu0 %v2059
  %2176 = vmatprep.subr.bf16.mxu0 0
  %2177 = vmatpush2.bf16.msra.mxu0 %v2058
  %2178 = vmatprep.subr.bf16.mxu0 0
  %2179 = vmatpush2.bf16.msra.mxu0 %v2057
  %2180 = vmatprep.subr.bf16.mxu0 0
  %2181 = vmatpush2.bf16.msra.mxu0 %v2056
  %2182 = vmatprep.mubr.bf16.mxu0 %v1377
  %2183 = vmatmul.mubr.bf16.gmra.mxu0 %v1376
  %v2184 = vpop.f32.mrf.mxu0
  %v2185 = vadd.f32 %v2137, %v2184
  %v2186 = vpop.f32.mrf.mxu0
  %v2187 = vpop.f32.mrf.mxu0
  %v2188 = vadd.f32 %v2140, %v2187
  %v2189 = vpop.f32.mrf.mxu0
  %2190 = vmatprep.mubr.bf16.mxu0 %v1382
  %2191 = vmatmul.mubr.bf16.gmra.mxu0 %v1381
  %v2192 = vpop.f32.mrf.mxu0
  %v2193 = vadd.f32 %v2145, %v2192
  %v2194 = vpop.f32.mrf.mxu0
  %v2195 = vpop.f32.mrf.mxu0
  %v2196 = vpop.f32.mrf.mxu0
  %2197 = vdwg.mxu0
  %2198 = vmatprep.subr.bf16.mxu0 0
  %2199 = vmatpush1.bf16.msra.mxu0 0
  %2200 = vmatprep.subr.bf16.mxu0 0
  %2201 = vmatpush1.bf16.msra.mxu0 0
  %2202 = vmatprep.subr.bf16.mxu0 0
  %2203 = vmatpush1.bf16.msra.mxu0 0
  %2204 = vmatprep.subr.bf16.mxu0 0
  %2205 = vmatpush1.bf16.msra.mxu0 0
  %2206 = vmatprep.subr.bf16.mxu0 0
  %2207 = vmatpush1.bf16.msra.mxu0 0
  %2208 = vmatprep.subr.bf16.mxu0 0
  %2209 = vmatpush1.bf16.msra.mxu0 %v2066
  %2210 = vmatprep.subr.bf16.mxu0 0
  %2211 = vmatpush1.bf16.msra.mxu0 %v2065
  %2212 = vmatprep.subr.bf16.mxu0 0
  %2213 = vmatpush1.bf16.msra.mxu0 %v2064
  %2214 = vmatprep.subr.bf16.mxu0 0
  %2215 = vmatpush2.bf16.msra.mxu0 0
  %2216 = vmatprep.subr.bf16.mxu0 0
  %2217 = vmatpush2.bf16.msra.mxu0 0
  %2218 = vmatprep.subr.bf16.mxu0 0
  %2219 = vmatpush2.bf16.msra.mxu0 0
  %2220 = vmatprep.subr.bf16.mxu0 0
  %2221 = vmatpush2.bf16.msra.mxu0 0
  %2222 = vmatprep.subr.bf16.mxu0 0
  %2223 = vmatpush2.bf16.msra.mxu0 0
  %2224 = vmatprep.subr.bf16.mxu0 0
  %2225 = vmatpush2.bf16.msra.mxu0 0
  %2226 = vmatprep.subr.bf16.mxu0 0
  %2227 = vmatpush2.bf16.msra.mxu0 0
  %2228 = vmatprep.subr.bf16.mxu0 0
  %2229 = vmatpush2.bf16.msra.mxu0 0
  %2230 = vmatprep.mubr.bf16.mxu0 0
  %2231 = vmatmul.mubr.bf16.gmra.mxu0 %v1673
  %v2232 = vpop.f32.mrf.mxu0
  %v2233 = vadd.f32 %v2185, %v2232
  %v2234 = vpop.f32.mrf.mxu0
  %v2235 = vpop.f32.mrf.mxu0
  %v2236 = vadd.f32 %v2188, %v2235
  %v2237 = vpop.f32.mrf.mxu0
  %2238 = vmatprep.mubr.bf16.mxu0 0
  %2239 = vmatmul.mubr.bf16.gmra.mxu0 %v1676
  %v2240 = vpop.f32.mrf.mxu0
  %v2241 = vadd.f32 %v2193, %v2240
  %v2242 = vpop.f32.mrf.mxu0
  %v2243 = vpop.f32.mrf.mxu0
  %v2244 = vpop.f32.mrf.mxu0
  %2245 = vdwg.mxu0
  %v2246 = vmax.f32 %v1809, %v2233
  %v2247 = vmax.f32 %v1812, %v2236
  %v2248 = vmax.f32 %v1817, %v2241
  %v2249 = vmax.f32 %v2246, 0.0
  %v2250 = vmax.f32 %v2247, 0.0
  %v2251 = vmax.f32 %v2248, 0.0
  %v2254 = vrot.slane %v2250, 2
  %v2255 = vrot.slane %v2251, 2
  %v2256 = vsel %vm243, %v2254, %v2255
  %v2259 = vmax.f32 %v2249, %v2256
  %v2260 = vmax.f32 %v2250, %v2255
  %v2262 = vrot.slane %v2259, 1
  %2263 = vrot.lane.b32.xlu0 %v2262, 80
  %v2264 = vpop.permute.xlu0 %2263
  %v2266 = vrot.slane %v2259, 2
  %2267 = vrot.lane.b32.xlu0 %v2266, 32
  %v2268 = vpop.permute.xlu0 %2267
  %v2270 = vrot.slane %v2259, 3
  %2271 = vrot.lane.b32.xlu0 %v2270, 112
  %v2272 = vpop.permute.xlu0 %2271
  %v2274 = vrot.slane %v2259, 4
  %2275 = vrot.lane.b32.xlu0 %v2274, 64
  %v2276 = vpop.permute.xlu0 %2275
  %v2278 = vsel %vm1169, %v2259, %v2264
  %v2279 = vsel %vm78, %v2264, %v2268
  %v2280 = vsel %vm1166, %v2279, %v2272
  %v2281 = vsel %vm76, %v2272, %v2276
  %v2283 = vrot.slane %v2260, 3
  %2284 = vrot.lane.b32.xlu0 %v2283, 112
  %v2285 = vpop.permute.xlu0 %2284
  %v2287 = vrot.slane %v2260, 4
  %2288 = vrot.lane.b32.xlu0 %v2287, 64
  %v2289 = vpop.permute.xlu0 %2288
  %v2291 = vsel %vm1166, %v2279, %v2285
  %v2292 = vsel %vm76, %v2285, %v2289
  %v2296 = vrot.slane %v2278, 4
  %v2297 = vrot.slane %v2291, 4
  %v2298 = vrot.slane %v2292, 4
  %v2299 = vrot.slane %v2289, 4
  %vm2304 = vcmask 1040384
  %v2305 = vsel %vm2304, %v2278, %v2296
  %v2306 = vsel %vm2304, %v2280, %v2297
  %v2307 = vsel %vm2304, %v2281, %v2298
  %v2308 = vsel %vm2304, %v2276, %v2299
  %v2309 = vpack.c.bf16 %v2305, %v2305
  %v2310 = vpack.c.bf16 %v2306, %v2306
  %v2311 = vpack.c.bf16 %v2307, %v2307
  %v2312 = vpack.c.bf16 %v2308, %v2308
  %v2313 = vld [vmem:[%s7] sm:$0xf]
  %v2314 = vld [vmem:[%s7 + $0x4] sm:$0xf]
  %v2315 = vld [vmem:[%s7 + $0x8] sm:$0xf]
  %v2316 = vld [vmem:[%s7 + $0xc] sm:$0xf]
  %v2317 = vld [vmem:[%s7 + $0x10] sm:$0xf]
  %v2318 = vld [vmem:[%s7 + $0x14] sm:$0xf]
  %v2319 = vld [vmem:[%s7 + $0x18] sm:$0xf]
  %v2320 = vld [vmem:[%s7 + $0x1c] sm:$0xf]
  %v2321 = vld [vmem:[%s7 + $0x20] sm:$0xf]
  %v2322 = vld [vmem:[%s7 + $0x24] sm:$0xf]
  %v2323 = vld [vmem:[%s7 + $0x28] sm:$0xf]
  %v2324 = vld [vmem:[%s7 + $0x2c] sm:$0xf]
  %v2325 = vld [vmem:[%s7 + $0x30] sm:$0xf]
  %v2326 = vld [vmem:[%s7 + $0x34] sm:$0xf]
  %v2327 = vld [vmem:[%s7 + $0x38] sm:$0xf]
  %v2328 = vld [vmem:[%s7 + $0x3c] sm:$0xf]
  %v2329 = vld [vmem:[%s7 + $0x40] sm:$0xf]
  %v2330 = vld [vmem:[%s7 + $0x44] sm:$0xf]
  %v2331 = vld [vmem:[%s7 + $0x48] sm:$0xf]
  %v2332 = vld [vmem:[%s7 + $0x4c] sm:$0xf]
  %v2333 = vld [vmem:[%s7 + $0x50] sm:$0xf]
  %v2334 = vld [vmem:[%s7 + $0x54] sm:$0xf]
  %v2335 = vld [vmem:[%s7 + $0x58] sm:$0xf]
  %v2336 = vld [vmem:[%s7 + $0x5c] sm:$0xf]
  %v2337 = vld [vmem:[%s7 + $0x60] sm:$0xf]
  %v2338 = vld [vmem:[%s7 + $0x64] sm:$0xf]
  %v2339 = vld [vmem:[%s7 + $0x68] sm:$0xf]
  %v2340 = vld [vmem:[%s7 + $0x6c] sm:$0xf]
  %v2341 = vld [vmem:[%s7 + $0x70] sm:$0xf]
  %v2342 = vld [vmem:[%s7 + $0x74] sm:$0xf]
  %v2343 = vld [vmem:[%s7 + $0x78] sm:$0xf]
  %v2344 = vld [vmem:[%s7 + $0x7c] sm:$0xf]
  %v2345 = vld [vmem:[%s7 + $0x80] sm:$0xf]
  %v2346 = vld [vmem:[%s7 + $0x84] sm:$0xf]
  %v2347 = vld [vmem:[%s7 + $0x88] sm:$0xf]
  %v2348 = vld [vmem:[%s7 + $0x8c] sm:$0xf]
  %v2349 = vld [vmem:[%s7 + $0x90] sm:$0xf]
  %v2350 = vld [vmem:[%s7 + $0x94] sm:$0xf]
  %v2351 = vld [vmem:[%s7 + $0x98] sm:$0xf]
  %v2352 = vld [vmem:[%s7 + $0x9c] sm:$0xf]
  %v2353 = vld [vmem:[%s7 + $0xa0] sm:$0xf]
  %v2354 = vld [vmem:[%s7 + $0xa4] sm:$0xf]
  %v2355 = vld [vmem:[%s7 + $0xa8] sm:$0xf]
  %v2356 = vld [vmem:[%s7 + $0xac] sm:$0xf]
  %v2357 = vld [vmem:[%s7 + $0xb0] sm:$0xf]
  %v2358 = vld [vmem:[%s7 + $0xb4] sm:$0xf]
  %v2359 = vld [vmem:[%s7 + $0xb8] sm:$0xf]
  %v2360 = vld [vmem:[%s7 + $0xbc] sm:$0xf]
  %v2361 = vld [vmem:[%s7 + $0xc0] sm:$0xf]
  %v2362 = vld [vmem:[%s7 + $0xc4] sm:$0xf]
  %v2363 = vld [vmem:[%s8] sm:$0x1]
  %v2365 = vlaneseq
  %v2366 = vshrl.u32 %v2365, 7
  %v2367 = vsub.s32 0, %v2366
  %v2368 = vrot.slane %v2363, %v2367
  %v2420 = vunpack.c.l.b16 %v2313
  %v2421 = vunpack.c.l.b16 %v2314
  %v2422 = vunpack.c.l.b16 %v2315
  %v2423 = vunpack.c.l.b16 %v2316
  %v2424 = vunpack.c.l.b16 %v2317
  %v2425 = vunpack.c.l.b16 %v2318
  %v2426 = vunpack.c.l.b16 %v2319
  %v2427 = vunpack.c.l.b16 %v2320
  %v2428 = vunpack.c.l.b16 %v2321
  %v2429 = vunpack.c.l.b16 %v2322
  %v2430 = vunpack.c.l.b16 %v2323
  %v2431 = vunpack.c.l.b16 %v2324
  %v2432 = vunpack.c.l.b16 %v2325
  %v2433 = vunpack.c.l.b16 %v2326
  %v2434 = vunpack.c.l.b16 %v2327
  %v2435 = vunpack.c.l.b16 %v2328
  %v2436 = vunpack.c.l.b16 %v2329
  %v2437 = vunpack.c.l.b16 %v2330
  %v2438 = vunpack.c.l.b16 %v2331
  %v2439 = vunpack.c.l.b16 %v2332
  %v2440 = vunpack.c.l.b16 %v2333
  %v2441 = vunpack.c.l.b16 %v2334
  %v2442 = vunpack.c.l.b16 %v2335
  %v2443 = vunpack.c.l.b16 %v2336
  %v2444 = vunpack.c.l.b16 %v2337
  %v2445 = vunpack.c.l.b16 %v2338
  %v2446 = vunpack.c.l.b16 %v2339
  %v2447 = vunpack.c.l.b16 %v2340
  %v2448 = vunpack.c.l.b16 %v2341
  %v2449 = vunpack.c.l.b16 %v2342
  %v2450 = vunpack.c.l.b16 %v2343
  %v2451 = vunpack.c.l.b16 %v2344
  %v2452 = vunpack.c.l.b16 %v2345
  %v2453 = vunpack.c.l.b16 %v2346
  %v2454 = vunpack.c.l.b16 %v2347
  %v2455 = vunpack.c.l.b16 %v2348
  %v2456 = vunpack.c.l.b16 %v2349
  %v2457 = vunpack.c.l.b16 %v2350
  %v2458 = vunpack.c.l.b16 %v2351
  %v2459 = vunpack.c.l.b16 %v2352
  %v2460 = vunpack.c.l.b16 %v2353
  %v2461 = vunpack.c.l.b16 %v2354
  %v2462 = vunpack.c.l.b16 %v2355
  %v2463 = vunpack.c.l.b16 %v2356
  %v2464 = vunpack.c.l.b16 %v2357
  %v2465 = vunpack.c.l.b16 %v2358
  %v2466 = vunpack.c.l.b16 %v2359
  %v2467 = vunpack.c.l.b16 %v2360
  %v2468 = vunpack.c.l.b16 %v2361
  %v2469 = vunpack.c.l.b16 %v2362
  %v2470 = vpack.c.b16 %v2421, %v2420
  %v2471 = vpack.c.b16 %v2423, %v2422
  %v2472 = vpack.c.b16 %v2425, %v2424
  %v2473 = vpack.c.b16 %v2427, %v2426
  %v2474 = vpack.c.b16 %v2429, %v2428
  %v2475 = vpack.c.b16 %v2431, %v2430
  %v2476 = vpack.c.b16 %v2433, %v2432
  %v2477 = vpack.c.b16 %v2435, %v2434
  %v2478 = vpack.c.b16 %v2437, %v2436
  %v2479 = vpack.c.b16 %v2439, %v2438
  %v2480 = vpack.c.b16 %v2441, %v2440
  %v2481 = vpack.c.b16 %v2443, %v2442
  %v2482 = vpack.c.b16 %v2445, %v2444
  %v2483 = vpack.c.b16 %v2447, %v2446
  %v2484 = vpack.c.b16 %v2449, %v2448
  %v2485 = vpack.c.b16 %v2451, %v2450
  %v2486 = vpack.c.b16 %v2453, %v2452
  %v2487 = vpack.c.b16 %v2455, %v2454
  %v2488 = vpack.c.b16 %v2457, %v2456
  %v2489 = vpack.c.b16 %v2459, %v2458
  %v2490 = vpack.c.b16 %v2461, %v2460
  %v2491 = vpack.c.b16 %v2463, %v2462
  %v2492 = vpack.c.b16 %v2465, %v2464
  %v2493 = vpack.c.b16 %v2467, %v2466
  %v2494 = vpack.c.b16 %v2469, %v2468
  %vm2520 = vcmask 130048
  %v2522 = vsel %vm2520, %v2312, 0
  %2524 = vmatprep.subr.bf16.mxu0 0
  %2525 = vmatpush1.bf16.msra.mxu0 %v2477
  %2526 = vmatprep.subr.bf16.mxu0 0
  %2527 = vmatpush1.bf16.msra.mxu0 %v2476
  %2528 = vmatprep.subr.bf16.mxu0 0
  %2529 = vmatpush1.bf16.msra.mxu0 %v2475
  %2530 = vmatprep.subr.bf16.mxu0 0
  %2531 = vmatpush1.bf16.msra.mxu0 %v2474
  %2532 = vmatprep.subr.bf16.mxu0 0
  %2533 = vmatpush1.bf16.msra.mxu0 %v2473
  %2534 = vmatprep.subr.bf16.mxu0 0
  %2535 = vmatpush1.bf16.msra.mxu0 %v2472
  %2536 = vmatprep.subr.bf16.mxu0 0
  %2537 = vmatpush1.bf16.msra.mxu0 %v2471
  %2538 = vmatprep.subr.bf16.mxu0 0
  %2539 = vmatpush1.bf16.msra.mxu0 %v2470
  %2540 = vmatprep.subr.bf16.mxu0 0
  %2541 = vmatpush2.bf16.msra.mxu0 %v2485
  %2542 = vmatprep.subr.bf16.mxu0 0
  %2543 = vmatpush2.bf16.msra.mxu0 %v2484
  %2544 = vmatprep.subr.bf16.mxu0 0
  %2545 = vmatpush2.bf16.msra.mxu0 %v2483
  %2546 = vmatprep.subr.bf16.mxu0 0
  %2547 = vmatpush2.bf16.msra.mxu0 %v2482
  %2548 = vmatprep.subr.bf16.mxu0 0
  %2549 = vmatpush2.bf16.msra.mxu0 %v2481
  %2550 = vmatprep.subr.bf16.mxu0 0
  %2551 = vmatpush2.bf16.msra.mxu0 %v2480
  %2552 = vmatprep.subr.bf16.mxu0 0
  %2553 = vmatpush2.bf16.msra.mxu0 %v2479
  %2554 = vmatprep.subr.bf16.mxu0 0
  %2555 = vmatpush2.bf16.msra.mxu0 %v2478
  %2556 = vmatprep.mubr.bf16.mxu0 %v2310
  %2557 = vmatmul.mubr.bf16.gmra.mxu0 %v2309
  %v2558 = vpop.f32.mrf.mxu0
  %v2559 = vadd.f32 %v2368, %v2558
  %v2560 = vpop.f32.mrf.mxu0
  %v2561 = vpop.f32.mrf.mxu0
  %v2562 = vpop.f32.mrf.mxu0
  %2563 = vdwg.mxu0
  %2564 = vmatprep.subr.bf16.mxu0 0
  %2565 = vmatpush1.bf16.msra.mxu0 %v2493
  %2566 = vmatprep.subr.bf16.mxu0 0
  %2567 = vmatpush1.bf16.msra.mxu0 %v2492
  %2568 = vmatprep.subr.bf16.mxu0 0
  %2569 = vmatpush1.bf16.msra.mxu0 %v2491
  %2570 = vmatprep.subr.bf16.mxu0 0
  %2571 = vmatpush1.bf16.msra.mxu0 %v2490
  %2572 = vmatprep.subr.bf16.mxu0 0
  %2573 = vmatpush1.bf16.msra.mxu0 %v2489
  %2574 = vmatprep.subr.bf16.mxu0 0
  %2575 = vmatpush1.bf16.msra.mxu0 %v2488
  %2576 = vmatprep.subr.bf16.mxu0 0
  %2577 = vmatpush1.bf16.msra.mxu0 %v2487
  %2578 = vmatprep.subr.bf16.mxu0 0
  %2579 = vmatpush1.bf16.msra.mxu0 %v2486
  %2580 = vmatprep.subr.bf16.mxu0 0
  %2581 = vmatpush2.bf16.msra.mxu0 0
  %2582 = vmatprep.subr.bf16.mxu0 0
  %2583 = vmatpush2.bf16.msra.mxu0 0
  %2584 = vmatprep.subr.bf16.mxu0 0
  %2585 = vmatpush2.bf16.msra.mxu0 0
  %2586 = vmatprep.subr.bf16.mxu0 0
  %2587 = vmatpush2.bf16.msra.mxu0 0
  %2588 = vmatprep.subr.bf16.mxu0 0
  %2589 = vmatpush2.bf16.msra.mxu0 0
  %2590 = vmatprep.subr.bf16.mxu0 0
  %2591 = vmatpush2.bf16.msra.mxu0 0
  %2592 = vmatprep.subr.bf16.mxu0 0
  %2593 = vmatpush2.bf16.msra.mxu0 0
  %2594 = vmatprep.subr.bf16.mxu0 0
  %2595 = vmatpush2.bf16.msra.mxu0 %v2494
  %2596 = vmatprep.mubr.bf16.mxu0 %v2522
  %2597 = vmatmul.mubr.bf16.gmra.mxu0 %v2311
  %v2598 = vpop.f32.mrf.mxu0
  %v2599 = vadd.f32 %v2559, %v2598
  %v2600 = vpop.f32.mrf.mxu0
  %v2601 = vpop.f32.mrf.mxu0
  %v2602 = vpop.f32.mrf.mxu0
  %2603 = vdwg.mxu0
  %v2604 = vmax.f32 %v2599, 0.0
  %v2605 = vpack.c.bf16 %v2604, %v2604
  %v2606 = vld [vmem:[%s9] sm:$0xf]
  %v2607 = vld [vmem:[%s9 + $0x4] sm:$0xf]
  %v2608 = vld [vmem:[%s9 + $0x8] sm:$0xf]
  %v2609 = vld [vmem:[%s9 + $0xc] sm:$0xf]
  %v2610 = vld [vmem:[%s9 + $0x10] sm:$0xf]
  %v2611 = vld [vmem:[%s9 + $0x14] sm:$0xf]
  %v2612 = vld [vmem:[%s9 + $0x18] sm:$0xf]
  %v2613 = vld [vmem:[%s9 + $0x1c] sm:$0xf]
  %v2614 = vld [vmem:[%s9 + $0x20] sm:$0xf]
  %v2615 = vld [vmem:[%s9 + $0x24] sm:$0xf]
  %v2616 = vld [vmem:[%s9 + $0x28] sm:$0xf]
  %v2617 = vld [vmem:[%s9 + $0x2c] sm:$0xf]
  %v2618 = vld [vmem:[%s9 + $0x30] sm:$0xf]
  %v2619 = vld [vmem:[%s9 + $0x34] sm:$0xf]
  %v2620 = vld [vmem:[%s9 + $0x38] sm:$0xf]
  %v2621 = vld [vmem:[%s9 + $0x3c] sm:$0xf]
  %v2622 = vld [vmem:[%s10] sm:$0x1]
  %v2624 = vlaneseq
  %v2625 = vshrl.u32 %v2624, 7
  %v2626 = vsub.s32 0, %v2625
  %v2627 = vrot.slane %v2622, %v2626
  %v2645 = vunpack.c.l.b16 %v2606
  %v2646 = vunpack.c.l.b16 %v2607
  %v2647 = vunpack.c.l.b16 %v2608
  %v2648 = vunpack.c.l.b16 %v2609
  %v2649 = vunpack.c.l.b16 %v2610
  %v2650 = vunpack.c.l.b16 %v2611
  %v2651 = vunpack.c.l.b16 %v2612
  %v2652 = vunpack.c.l.b16 %v2613
  %v2653 = vunpack.c.l.b16 %v2614
  %v2654 = vunpack.c.l.b16 %v2615
  %v2655 = vunpack.c.l.b16 %v2616
  %v2656 = vunpack.c.l.b16 %v2617
  %v2657 = vunpack.c.l.b16 %v2618
  %v2658 = vunpack.c.l.b16 %v2619
  %v2659 = vunpack.c.l.b16 %v2620
  %v2660 = vunpack.c.l.b16 %v2621
  %v2661 = vpack.c.b16 %v2646, %v2645
  %v2662 = vpack.c.b16 %v2648, %v2647
  %v2663 = vpack.c.b16 %v2650, %v2649
  %v2664 = vpack.c.b16 %v2652, %v2651
  %v2665 = vpack.c.b16 %v2654, %v2653
  %v2666 = vpack.c.b16 %v2656, %v2655
  %v2667 = vpack.c.b16 %v2658, %v2657
  %v2668 = vpack.c.b16 %v2660, %v2659
  %2677 = vmatprep.subr.bf16.mxu0 0
  %2678 = vmatpush1.bf16.msra.mxu0 %v2668
  %2679 = vmatprep.subr.bf16.mxu0 0
  %2680 = vmatpush1.bf16.msra.mxu0 %v2667
  %2681 = vmatprep.subr.bf16.mxu0 0
  %2682 = vmatpush1.bf16.msra.mxu0 %v2666
  %2683 = vmatprep.subr.bf16.mxu0 0
  %2684 = vmatpush1.bf16.msra.mxu0 %v2665
  %2685 = vmatprep.subr.bf16.mxu0 0
  %2686 = vmatpush1.bf16.msra.mxu0 %v2664
  %2687 = vmatprep.subr.bf16.mxu0 0
  %2688 = vmatpush1.bf16.msra.mxu0 %v2663
  %2689 = vmatprep.subr.bf16.mxu0 0
  %2690 = vmatpush1.bf16.msra.mxu0 %v2662
  %2691 = vmatprep.subr.bf16.mxu0 0
  %2692 = vmatpush1.bf16.msra.mxu0 %v2661
  %2693 = vmatprep.subr.bf16.mxu0 0
  %2694 = vmatpush2.bf16.msra.mxu0 0
  %2695 = vmatprep.subr.bf16.mxu0 0
  %2696 = vmatpush2.bf16.msra.mxu0 0
  %2697 = vmatprep.subr.bf16.mxu0 0
  %2698 = vmatpush2.bf16.msra.mxu0 0
  %2699 = vmatprep.subr.bf16.mxu0 0
  %2700 = vmatpush2.bf16.msra.mxu0 0
  %2701 = vmatprep.subr.bf16.mxu0 0
  %2702 = vmatpush2.bf16.msra.mxu0 0
  %2703 = vmatprep.subr.bf16.mxu0 0
  %2704 = vmatpush2.bf16.msra.mxu0 0
  %2705 = vmatprep.subr.bf16.mxu0 0
  %2706 = vmatpush2.bf16.msra.mxu0 0
  %2707 = vmatprep.subr.bf16.mxu0 0
  %2708 = vmatpush2.bf16.msra.mxu0 0
  %2709 = vmatprep.mubr.bf16.mxu0 0
  %2710 = vmatmul.mubr.bf16.gmra.mxu0 %v2605
  %v2711 = vpop.f32.mrf.mxu0
  %v2712 = vadd.f32 %v2627, %v2711
  %v2713 = vpop.f32.mrf.mxu0
  %v2714 = vpop.f32.mrf.mxu0
  %v2715 = vpop.f32.mrf.mxu0
  %2716 = vdwg.mxu0
  %v2717 = vmax.f32 %v2712, 0.0
  %v2718 = vpack.c.bf16 %v2717, %v2717
  %v2719 = vld [vmem:[%s11] sm:$0xf]
  %v2720 = vld [vmem:[%s11 + $0x4] sm:$0xf]
  %v2721 = vld [vmem:[%s11 + $0x8] sm:$0xf]
  %v2722 = vld [vmem:[%s11 + $0xc] sm:$0xf]
  %v2723 = vld [vmem:[%s11 + $0x10] sm:$0xf]
  %v2724 = vld [vmem:[%s11 + $0x14] sm:$0xf]
  %v2725 = vld [vmem:[%s11 + $0x18] sm:$0xf]
  %v2726 = vld [vmem:[%s11 + $0x1c] sm:$0xf]
  %v2727 = vld [vmem:[%s11 + $0x20] sm:$0xf]
  %v2728 = vld [vmem:[%s11 + $0x24] sm:$0xf]
  %v2729 = vld [vmem:[%s11 + $0x28] sm:$0xf]
  %v2730 = vld [vmem:[%s11 + $0x2c] sm:$0xf]
  %v2731 = vld [vmem:[%s11 + $0x30] sm:$0xf]
  %v2732 = vld [vmem:[%s11 + $0x34] sm:$0xf]
  %v2733 = vld [vmem:[%s11 + $0x38] sm:$0xf]
  %v2734 = vld [vmem:[%s11 + $0x3c] sm:$0xf]
  %v2735 = vld [vmem:[%s12] sm:$0x1]
  %v2737 = vlaneseq
  %v2738 = vshrl.u32 %v2737, 7
  %v2739 = vsub.s32 0, %v2738
  %v2740 = vrot.slane %v2735, %v2739
  %v2758 = vunpack.c.l.b16 %v2719
  %v2759 = vunpack.c.l.b16 %v2720
  %v2760 = vunpack.c.l.b16 %v2721
  %v2761 = vunpack.c.l.b16 %v2722
  %v2762 = vunpack.c.l.b16 %v2723
  %v2763 = vunpack.c.l.b16 %v2724
  %v2764 = vunpack.c.l.b16 %v2725
  %v2765 = vunpack.c.l.b16 %v2726
  %v2766 = vunpack.c.l.b16 %v2727
  %v2767 = vunpack.c.l.b16 %v2728
  %v2768 = vunpack.c.l.b16 %v2729
  %v2769 = vunpack.c.l.b16 %v2730
  %v2770 = vunpack.c.l.b16 %v2731
  %v2771 = vunpack.c.l.b16 %v2732
  %v2772 = vunpack.c.l.b16 %v2733
  %v2773 = vunpack.c.l.b16 %v2734
  %v2774 = vpack.c.b16 %v2759, %v2758
  %v2775 = vpack.c.b16 %v2761, %v2760
  %v2776 = vpack.c.b16 %v2763, %v2762
  %v2777 = vpack.c.b16 %v2765, %v2764
  %v2778 = vpack.c.b16 %v2767, %v2766
  %v2779 = vpack.c.b16 %v2769, %v2768
  %v2780 = vpack.c.b16 %v2771, %v2770
  %v2781 = vpack.c.b16 %v2773, %v2772
  %2790 = vmatprep.subr.bf16.mxu0 0
  %2791 = vmatpush1.bf16.msra.mxu0 %v2781
  %2792 = vmatprep.subr.bf16.mxu0 0
  %2793 = vmatpush1.bf16.msra.mxu0 %v2780
  %2794 = vmatprep.subr.bf16.mxu0 0
  %2795 = vmatpush1.bf16.msra.mxu0 %v2779
  %2796 = vmatprep.subr.bf16.mxu0 0
  %2797 = vmatpush1.bf16.msra.mxu0 %v2778
  %2798 = vmatprep.subr.bf16.mxu0 0
  %2799 = vmatpush1.bf16.msra.mxu0 %v2777
  %2800 = vmatprep.subr.bf16.mxu0 0
  %2801 = vmatpush1.bf16.msra.mxu0 %v2776
  %2802 = vmatprep.subr.bf16.mxu0 0
  %2803 = vmatpush1.bf16.msra.mxu0 %v2775
  %2804 = vmatprep.subr.bf16.mxu0 0
  %2805 = vmatpush1.bf16.msra.mxu0 %v2774
  %2806 = vmatprep.subr.bf16.mxu0 0
  %2807 = vmatpush2.bf16.msra.mxu0 0
  %2808 = vmatprep.subr.bf16.mxu0 0
  %2809 = vmatpush2.bf16.msra.mxu0 0
  %2810 = vmatprep.subr.bf16.mxu0 0
  %2811 = vmatpush2.bf16.msra.mxu0 0
  %2812 = vmatprep.subr.bf16.mxu0 0
  %2813 = vmatpush2.bf16.msra.mxu0 0
  %2814 = vmatprep.subr.bf16.mxu0 0
  %2815 = vmatpush2.bf16.msra.mxu0 0
  %2816 = vmatprep.subr.bf16.mxu0 0
  %2817 = vmatpush2.bf16.msra.mxu0 0
  %2818 = vmatprep.subr.bf16.mxu0 0
  %2819 = vmatpush2.bf16.msra.mxu0 0
  %2820 = vmatprep.subr.bf16.mxu0 0
  %2821 = vmatpush2.bf16.msra.mxu0 0
  %2822 = vmatprep.mubr.bf16.mxu0 0
  %2823 = vmatmul.mubr.bf16.gmra.mxu0 %v2718
  %v2824 = vpop.f32.mrf.mxu0
  %v2825 = vadd.f32 %v2740, %v2824
  %v2826 = vpop.f32.mrf.mxu0
  %v2827 = vpop.f32.mrf.mxu0
  %v2828 = vpop.f32.mrf.mxu0
  %2829 = vdwg.mxu0
  %v2830 = vmax.f32 %v2825, 0.0
  %v2831 = vpack.c.bf16 %v2830, %v2830
  %v2832 = vld [vmem:[%s13] sm:$0xf]
  %v2833 = vld [vmem:[%s13 + $0x4] sm:$0xf]
  %v2834 = vld [vmem:[%s13 + $0x8] sm:$0xf]
  %v2835 = vld [vmem:[%s13 + $0xc] sm:$0xf]
  %v2836 = vld [vmem:[%s13 + $0x10] sm:$0xf]
  %v2837 = vld [vmem:[%s13 + $0x14] sm:$0xf]
  %v2838 = vld [vmem:[%s13 + $0x18] sm:$0xf]
  %v2839 = vld [vmem:[%s13 + $0x1c] sm:$0xf]
  %v2840 = vld [vmem:[%s13 + $0x20] sm:$0xf]
  %v2841 = vld [vmem:[%s13 + $0x24] sm:$0xf]
  %v2842 = vld [vmem:[%s13 + $0x28] sm:$0xf]
  %v2843 = vld [vmem:[%s13 + $0x2c] sm:$0xf]
  %v2844 = vld [vmem:[%s13 + $0x30] sm:$0xf]
  %v2845 = vld [vmem:[%s13 + $0x34] sm:$0xf]
  %v2846 = vld [vmem:[%s13 + $0x38] sm:$0xf]
  %v2847 = vld [vmem:[%s13 + $0x3c] sm:$0xf]
  %v2848 = vld [vmem:[%s14] sm:$0x1]
  %v2850 = vlaneseq
  %v2851 = vshrl.u32 %v2850, 7
  %v2852 = vsub.s32 0, %v2851
  %v2853 = vrot.slane %v2848, %v2852
  %v2871 = vunpack.c.l.b16 %v2832
  %v2872 = vunpack.c.l.b16 %v2833
  %v2873 = vunpack.c.l.b16 %v2834
  %v2874 = vunpack.c.l.b16 %v2835
  %v2875 = vunpack.c.l.b16 %v2836
  %v2876 = vunpack.c.l.b16 %v2837
  %v2877 = vunpack.c.l.b16 %v2838
  %v2878 = vunpack.c.l.b16 %v2839
  %v2879 = vunpack.c.l.b16 %v2840
  %v2880 = vunpack.c.l.b16 %v2841
  %v2881 = vunpack.c.l.b16 %v2842
  %v2882 = vunpack.c.l.b16 %v2843
  %v2883 = vunpack.c.l.b16 %v2844
  %v2884 = vunpack.c.l.b16 %v2845
  %v2885 = vunpack.c.l.b16 %v2846
  %v2886 = vunpack.c.l.b16 %v2847
  %v2887 = vpack.c.b16 %v2872, %v2871
  %v2888 = vpack.c.b16 %v2874, %v2873
  %v2889 = vpack.c.b16 %v2876, %v2875
  %v2890 = vpack.c.b16 %v2878, %v2877
  %v2891 = vpack.c.b16 %v2880, %v2879
  %v2892 = vpack.c.b16 %v2882, %v2881
  %v2893 = vpack.c.b16 %v2884, %v2883
  %v2894 = vpack.c.b16 %v2886, %v2885
  %2903 = vmatprep.subr.bf16.mxu0 0
  %2904 = vmatpush1.bf16.msra.mxu0 %v2894
  %2905 = vmatprep.subr.bf16.mxu0 0
  %2906 = vmatpush1.bf16.msra.mxu0 %v2893
  %2907 = vmatprep.subr.bf16.mxu0 0
  %2908 = vmatpush1.bf16.msra.mxu0 %v2892
  %2909 = vmatprep.subr.bf16.mxu0 0
  %2910 = vmatpush1.bf16.msra.mxu0 %v2891
  %2911 = vmatprep.subr.bf16.mxu0 0
  %2912 = vmatpush1.bf16.msra.mxu0 %v2890
  %2913 = vmatprep.subr.bf16.mxu0 0
  %2914 = vmatpush1.bf16.msra.mxu0 %v2889
  %2915 = vmatprep.subr.bf16.mxu0 0
  %2916 = vmatpush1.bf16.msra.mxu0 %v2888
  %2917 = vmatprep.subr.bf16.mxu0 0
  %2918 = vmatpush1.bf16.msra.mxu0 %v2887
  %2919 = vmatprep.subr.bf16.mxu0 0
  %2920 = vmatpush2.bf16.msra.mxu0 0
  %2921 = vmatprep.subr.bf16.mxu0 0
  %2922 = vmatpush2.bf16.msra.mxu0 0
  %2923 = vmatprep.subr.bf16.mxu0 0
  %2924 = vmatpush2.bf16.msra.mxu0 0
  %2925 = vmatprep.subr.bf16.mxu0 0
  %2926 = vmatpush2.bf16.msra.mxu0 0
  %2927 = vmatprep.subr.bf16.mxu0 0
  %2928 = vmatpush2.bf16.msra.mxu0 0
  %2929 = vmatprep.subr.bf16.mxu0 0
  %2930 = vmatpush2.bf16.msra.mxu0 0
  %2931 = vmatprep.subr.bf16.mxu0 0
  %2932 = vmatpush2.bf16.msra.mxu0 0
  %2933 = vmatprep.subr.bf16.mxu0 0
  %2934 = vmatpush2.bf16.msra.mxu0 0
  %2935 = vmatprep.mubr.bf16.mxu0 0
  %2936 = vmatmul.mubr.bf16.gmra.mxu0 %v2831
  %v2937 = vpop.f32.mrf.mxu0
  %v2938 = vadd.f32 %v2853, %v2937
  %v2939 = vpop.f32.mrf.mxu0
  %v2940 = vpop.f32.mrf.mxu0
  %v2941 = vpop.f32.mrf.mxu0
  %2942 = vdwg.mxu0
  %vm2943 = vcmask 1024
  %2944 = vst.msk [vmem:[%s15] sm:$0x3] %vm2943, %v2938
  // Predicated region
  $region62: #{net_forward.1} parent=0 // pred_check
    _
  $region63: #{net_forward.1} parent=0 // pred_check_branch
    %2946 = sbr.rel (0) target = $region65
  $region64: #{net_forward.1} parent=0 // pred_region
    _
  $region65: #{net_forward.1} parent=0 // pred_fallthru
    _
  // Predicated region
  $region66: #{net_forward.1} parent=0 // pred_check
    _
  $region67: #{net_forward.1} parent=0 // pred_check_branch
    %2948 = sbr.rel (0) target = $region69
  $region68: #{net_forward.1} parent=0 // pred_region
    _
  $region69: #{net_forward.1} parent=0 // pred_fallthru
    _

</llo_original>
